<compile_context>
chip_gen: v5e
topology: v5e:2x2
jax: 0.10.0
libtpu: 0.0.40
codegen_flags: <defaults>
</compile_context>

<pallas_src>
import numpy as np
import jax
import jax.numpy as jnp
from jax.experimental import pallas as pl
from jax.experimental.pallas import tpu as pltpu

SEQ_LEN = 256            # ModelBase.InputShape[0] (scaled down from 2000)
CHANNELS = 1             # ModelBase.InputShape[1]
CONV_K = 5               # Model4.ConvolutionKernelSize
CONV_PAD = 2             # Model4.ConvolutionPadding
POOL_K = 2               # Model4.PoolingKernelSize
FC_DIM = (SEQ_LEN // POOL_K) * CHANNELS   # 128
M_TILE = 128             # MXU-height batch tile (could be 256 on v6e/v7x)

# NOTE: at the original L=2000 one would additionally (a) exploit real-input
# DFT symmetry (half-spectrum + lane mirror) and (b) tile the DFT K axis /
# raise vmem_limit_bytes so the trig matrix need not be fully VMEM-resident on
# v7x (64 MiB).  At this scaled-down L=256 the half-spectrum (129 bins) pads
# back to 256 lanes so it buys nothing, so it is intentionally not done here.


# ----------------------------------------------------------------------------
# shared in-kernel building blocks
# ----------------------------------------------------------------------------
def _dft_mag(x_ref, trig_ref):
    """(M_TILE, L) f32 batch tile -> |DFT| (M_TILE, L) f32 via one MXU matmul."""
    x = x_ref[...].astype(jnp.bfloat16)
    y = jnp.dot(x, trig_ref[...], preferred_element_type=jnp.float32)   # (M_TILE, 2L)
    xr = y[:, :SEQ_LEN]
    xi = y[:, SEQ_LEN:]
    # |FFT(x)|; the 'forward' 1/L factor is dropped -- it cancels in x / x.max().
    return jnp.sqrt(xr * xr + xi * xi)


def _head(xn, cw_ref, cb_ref, w1_ref, b1_ref, w2_ref, b2_ref):
    """Normalised spectrum tile -> relu(fc2(relu(fc1(maxpool(relu(conv(xn)))))))."""
    # relu(Conv1d(1->1, k=5, pad=2)): rolls + edge masks; centre tap needs no mask.
    lane = jax.lax.broadcasted_iota(jnp.int32, xn.shape, 1)
    acc = cw_ref[CONV_PAD] * xn
    for k in range(CONV_K):
        if k == CONV_PAD:
            continue
        off = k - CONV_PAD
        shifted = pltpu.roll(xn, shift=(-off) % SEQ_LEN, axis=1)   # shifted[l] = xn[l+off]
        valid = (lane + off >= 0) & (lane + off < SEQ_LEN)
        acc = acc + cw_ref[k] * jnp.where(valid, shifted, 0.0)
    conv = jnp.maximum(acc + cb_ref[0], 0.0)

    # MaxPool1d(2) without the (B, L/2, 2) re-layout: even lanes of `pairmax`
    # hold the pooled values; odd lanes are killed by the zero odd rows of w1_ref.
    pairmax = jnp.maximum(conv, pltpu.roll(conv, shift=SEQ_LEN - 1, axis=1))

    # relu(fc1), relu(fc2). Weights pre-transposed / expanded, bf16 operands,
    # f32 accumulation.
    h1 = jnp.maximum(
        jnp.dot(pairmax.astype(jnp.bfloat16), w1_ref[...],
                preferred_element_type=jnp.float32) + b1_ref[...], 0.0)
    h2 = jnp.maximum(
        jnp.dot(h1.astype(jnp.bfloat16), w2_ref[...],
                preferred_element_type=jnp.float32) + b2_ref[...], 0.0)
    return h2


# ----------------------------------------------------------------------------
# kernels
# ----------------------------------------------------------------------------
def fused_kernel(x_ref, trig_ref, cw_ref, cb_ref,
                 w1_ref, b1_ref, w2_ref, b2_ref, out_ref):
    """Single-tile batch: whole forward in one kernel (no HBM round trip)."""
    mag = _dft_mag(x_ref, trig_ref)
    # Global max of this (only) tile.  Padded batch rows are all-zero input so
    # their |FFT| is 0 and never wins the max (torch semantics preserved).
    gmax = jnp.max(mag, axis=1, keepdims=True)          # (M_TILE, 1) lane reduce
    gmax = jnp.max(gmax, axis=0, keepdims=True)         # (1, 1)     sublane reduce
    xn = mag * (1.0 / gmax)                             # scalar-broadcast multiply
    out_ref[...] = _head(xn, cw_ref, cb_ref, w1_ref, b1_ref, w2_ref, b2_ref)


def dft_mag_kernel(x_ref, trig_ref, mag_ref):
    # x_ref: (M_TILE, L) f32 batch tile; trig_ref: (L, 2L) bf16 = [cos | sin].
    mag_ref[...] = _dft_mag(x_ref, trig_ref)


def head_kernel(inv_ref, mag_ref, cw_ref, cb_ref,
                w1_ref, b1_ref, w2_ref, b2_ref, out_ref):
    # inv_ref: (1,1) SMEM scalar = 1 / global_max(|FFT|)  (torch: x / x.max()).
    xn = mag_ref[...] * inv_ref[0, 0]                                    # (M_TILE, L)
    out_ref[...] = _head(xn, cw_ref, cb_ref, w1_ref, b1_ref, w2_ref, b2_ref)


# ----------------------------------------------------------------------------
# wrapper
# ----------------------------------------------------------------------------
def model4_forward(x2d, kparams):
    """x2d: (B, SEQ_LEN) f32 (the NCW input with the C=1 axis squeezed)."""
    trig, cw, cb, w1exp, b1, w2t, b2 = kparams
    B = x2d.shape[0]
    nbt = pl.cdiv(B, M_TILE)
    b_pad = nbt * M_TILE
    x_pad = jnp.pad(x2d, ((0, b_pad - B), (0, 0)))

    vmem = pltpu.MemorySpace.VMEM
    smem = pltpu.MemorySpace.SMEM
    mc_params = pltpu.CompilerParams(dimension_semantics=("parallel",))

    if nbt == 1:
        # ---- fully fused path: one pallas_call, no intermediate HBM traffic --
        out = pl.pallas_call(
            fused_kernel,
            out_shape=jax.ShapeDtypeStruct((b_pad, FC_DIM), jnp.float32),
            grid=(nbt,),
            in_specs=[
                pl.BlockSpec((M_TILE, SEQ_LEN), lambda b: (b, 0), memory_space=vmem),
                pl.BlockSpec((SEQ_LEN, 2 * SEQ_LEN), lambda b: (0, 0), memory_space=vmem),
                pl.BlockSpec(memory_space=smem),                                   # conv w (5,)
                pl.BlockSpec(memory_space=smem),                                   # conv b (1,)
                pl.BlockSpec((SEQ_LEN, FC_DIM), lambda b: (0, 0), memory_space=vmem),
                pl.BlockSpec((1, FC_DIM), lambda b: (0, 0), memory_space=vmem),
                pl.BlockSpec((FC_DIM, FC_DIM), lambda b: (0, 0), memory_space=vmem),
                pl.BlockSpec((1, FC_DIM), lambda b: (0, 0), memory_space=vmem),
            ],
            out_specs=pl.BlockSpec((M_TILE, FC_DIM), lambda b: (b, 0), memory_space=vmem),
            compiler_params=mc_params,
        )(x_pad, trig, cw, cb, w1exp, b1, w2t, b2)
        return out[:B]

    # ---- multi-tile path: global x.max() crosses batch tiles, so split ------
    # kernel 1: |FFT(x)| (one bf16 MXU matmul per batch tile)
    mag = pl.pallas_call(
        dft_mag_kernel,
        out_shape=jax.ShapeDtypeStruct((b_pad, SEQ_LEN), jnp.float32),
        grid=(nbt,),
        in_specs=[
            pl.BlockSpec((M_TILE, SEQ_LEN), lambda b: (b, 0), memory_space=vmem),
            pl.BlockSpec((SEQ_LEN, 2 * SEQ_LEN), lambda b: (0, 0), memory_space=vmem),
        ],
        out_specs=pl.BlockSpec((M_TILE, SEQ_LEN), lambda b: (b, 0), memory_space=vmem),
        compiler_params=mc_params,
    )(x_pad, trig)

    # Global max over the real batch rows (exact torch semantics across tiles);
    # one scalar reciprocal, no per-element divide inside the head kernel.
    inv_max = (1.0 / jnp.max(mag[:B])).reshape(1, 1).astype(jnp.float32)

    # kernel 2: normalise + conv + pool + fc1 + fc2
    out = pl.pallas_call(
        head_kernel,
        out_shape=jax.ShapeDtypeStruct((b_pad, FC_DIM), jnp.float32),
        grid=(nbt,),
        in_specs=[
            pl.BlockSpec(memory_space=smem),                                   # 1/max (1,1)
            pl.BlockSpec((M_TILE, SEQ_LEN), lambda b: (b, 0), memory_space=vmem),
            pl.BlockSpec(memory_space=smem),                                   # conv w (5,)
            pl.BlockSpec(memory_space=smem),                                   # conv b (1,)
            pl.BlockSpec((SEQ_LEN, FC_DIM), lambda b: (0, 0), memory_space=vmem),
            pl.BlockSpec((1, FC_DIM), lambda b: (0, 0), memory_space=vmem),
            pl.BlockSpec((FC_DIM, FC_DIM), lambda b: (0, 0), memory_space=vmem),
            pl.BlockSpec((1, FC_DIM), lambda b: (0, 0), memory_space=vmem),
        ],
        out_specs=pl.BlockSpec((M_TILE, FC_DIM), lambda b: (b, 0), memory_space=vmem),
        compiler_params=mc_params,
    )(inv_max, mag, cw, cb, w1exp, b1, w2t, b2)

    return out[:B]


# ----------------------------------------------------------------------------
# params / reference
# ----------------------------------------------------------------------------
def init_params(key):
    """Deterministic synthetic init mirroring Model4.__init__ (xavier_uniform)."""
    k1, k2, k3, k4, k5, k6 = jax.random.split(key, 6)
    # Conv1d(1, 1, 5): xavier bound = sqrt(6 / (fan_in + fan_out)) = sqrt(6 / 10)
    bc = float(np.sqrt(6.0 / (CONV_K * CHANNELS + CONV_K * CHANNELS)))
    cw = jax.random.uniform(k1, (CONV_K,), jnp.float32, -bc, bc)
    cbb = float(1.0 / np.sqrt(CONV_K * CHANNELS))
    cb = jax.random.uniform(k2, (1,), jnp.float32, -cbb, cbb)
    # Linear(FC_DIM, FC_DIM): xavier bound = sqrt(6 / (2 * FC_DIM))
    bf = float(np.sqrt(6.0 / (FC_DIM + FC_DIM)))
    bb = float(1.0 / np.sqrt(FC_DIM))
    w1 = jax.random.uniform(k3, (FC_DIM, FC_DIM), jnp.float32, -bf, bf)   # (out, in)
    b1 = jax.random.uniform(k4, (1, FC_DIM), jnp.float32, -bb, bb)
    w2 = jax.random.uniform(k5, (FC_DIM, FC_DIM), jnp.float32, -bf, bf)
    b2 = jax.random.uniform(k6, (1, FC_DIM), jnp.float32, -bb, bb)
    return cw, cb, w1, b1, w2, b2


def prepare_kernel_params(params):
    """One-time host-side weight prep (trig matrix, bf16 casts, fc1 expansion)."""
    cw, cb, w1, b1, w2, b2 = params
    # Real DFT: X[k] = sum_n x[n] * exp(-2*pi*i*n*k / L).  cos||sin concatenated
    # into a single (L, 2L) RHS so the DFT is one MXU matmul; stored in bf16.
    n = np.arange(SEQ_LEN)
    ang = -2.0 * np.pi * np.outer(n, n) / SEQ_LEN
    trig = jnp.asarray(np.concatenate([np.cos(ang), np.sin(ang)], axis=1), jnp.bfloat16)
    # fc1 weight (out,in) -> (in,out), expanded to (L, FC_DIM) with zero rows at odd
    # indices so the even-lane (maxpool stride-2) selection is folded into the matmul.
    w1t = w1.T                                                        # (in, out)
    w1exp = jnp.zeros((SEQ_LEN, FC_DIM), jnp.float32).at[0::POOL_K].set(w1t)
    w1exp = w1exp.astype(jnp.bfloat16)
    w2t = w2.T.astype(jnp.bfloat16)
    return trig, cw, cb, w1exp, b1, w2t, b2


def reference(x2d, params):
    """Pure-JAX f32 reference reproducing the PyTorch forward semantics."""
    cw, cb, w1, b1, w2, b2 = params
    B = x2d.shape[0]
    X = jnp.fft.fft(x2d.astype(jnp.complex64), axis=1) / SEQ_LEN       # norm='forward'
    mag = jnp.abs(X).astype(jnp.float32)[:, :SEQ_LEN]
    xn = mag / jnp.max(mag)
    xpad = jnp.pad(xn, ((0, 0), (CONV_PAD, CONV_PAD)))
    conv = sum(cw[k] * xpad[:, k:k + SEQ_LEN] for k in range(CONV_K)) + cb[0]
    conv = jnp.maximum(conv, 0.0)
    pooled = jnp.max(conv.reshape(B, SEQ_LEN // POOL_K, POOL_K), axis=-1)
    h1 = jnp.maximum(pooled @ w1.T + b1, 0.0)
    h2 = jnp.maximum(h1 @ w2.T + b2, 0.0)
    return h2


if __name__ == "__main__":
    key = jax.random.PRNGKey(0)
    pkey, xkey, xkey2 = jax.random.split(key, 3)
    params = init_params(pkey)
    kparams = prepare_kernel_params(params)

    fwd = jax.jit(model4_forward)

    # PyTorch-style NCW input (B, C=1, L); squeeze the channel axis for the kernel.
    B = 2
    x = jax.random.normal(xkey, (B, CHANNELS, SEQ_LEN), jnp.float32)
    x2d = x.reshape(B, SEQ_LEN)
    out = jax.block_until_ready(fwd(x2d, kparams))
    ref = reference(x2d, params)
    # Kernel matmuls use bf16 operands with f32 accumulation, so the comparison
    # against the f32 reference uses a bf16-level tolerance.
    np.testing.assert_allclose(np.asarray(out), np.asarray(ref), rtol=2e-2, atol=2e-2)

    # Also exercise the multi-tile (B > M_TILE) two-call path, whose global
    # x.max() must cross batch tiles.  Looser tolerance: this checks the tiling
    # plumbing, the numerics are the same bf16 matmuls as above.
    B2 = M_TILE + 2
    x2 = jax.random.normal(xkey2, (B2, SEQ_LEN), jnp.float32)
    out2 = jax.block_until_ready(fwd(x2, kparams))
    ref2 = reference(x2, params)
    np.testing.assert_allclose(np.asarray(out2), np.asarray(ref2), rtol=5e-2, atol=5e-2)

    print("KERNEL_OK")
</pallas_src>

<mosaic_0001>
module attributes {stable_mosaic.version = 11 : i64} {
  func.func @fused_kernel(%arg0: i32, %arg1: memref<128x256xf32, #tpu.memory_space<vmem>>, %arg2: memref<256x512xbf16, #tpu.memory_space<vmem>>, %arg3: memref<5xf32, #tpu.memory_space<smem>>, %arg4: memref<1xf32, #tpu.memory_space<smem>>, %arg5: memref<256x128xbf16, #tpu.memory_space<vmem>>, %arg6: memref<1x128xf32, #tpu.memory_space<vmem>>, %arg7: memref<128x128xbf16, #tpu.memory_space<vmem>>, %arg8: memref<1x128xf32, #tpu.memory_space<vmem>>, %arg9: memref<128x128xf32, #tpu.memory_space<vmem>>) attributes {dimension_semantics = [#tpu.dimension_semantics<parallel>], iteration_bounds = array<i64: 1>, scalar_prefetch = 0 : i64, scratch_operands = 0 : i64, tpu.core_type = #tpu.core_type<tc>, window_params = [{transform_indices = @transform_0, window_bounds = array<i64: 128, 256>}, {pipeline_mode = #tpu.pipeline_mode<synchronous>, transform_indices = @transform_1, window_bounds = array<i64: 256, 512>}, {transform_indices = @transform_2, window_bounds = array<i64: 5>}, {transform_indices = @transform_3, window_bounds = array<i64: 1>}, {pipeline_mode = #tpu.pipeline_mode<synchronous>, transform_indices = @transform_4, window_bounds = array<i64: 256, 128>}, {pipeline_mode = #tpu.pipeline_mode<synchronous>, transform_indices = @transform_5, window_bounds = array<i64: 1, 128>}, {pipeline_mode = #tpu.pipeline_mode<synchronous>, transform_indices = @transform_6, window_bounds = array<i64: 128, 128>}, {pipeline_mode = #tpu.pipeline_mode<synchronous>, transform_indices = @transform_7, window_bounds = array<i64: 1, 128>}, {transform_indices = @transform_8, window_bounds = array<i64: 128, 128>}]} {
    %c0 = arith.constant 0 : index
    %c0_0 = arith.constant 0 : index
    %0 = vector.load %arg1[%c0, %c0_0] : memref<128x256xf32, #tpu.memory_space<vmem>>, vector<128x256xf32>
    %1 = arith.truncf %0 : vector<128x256xf32> to vector<128x256xbf16>
    %c0_1 = arith.constant 0 : index
    %c0_2 = arith.constant 0 : index
    %2 = vector.load %arg2[%c0_1, %c0_2] : memref<256x512xbf16, #tpu.memory_space<vmem>>, vector<256x512xbf16>
    %cst = arith.constant dense<0.000000e+00> : vector<128x512xf32>
    %3 = tpu.matmul %1, %2, %cst {dimension_numbers = #tpu.dot_dimension_numbers<[1], [0], [0], [1], [0, 0, 1, 1], [], []>} : vector<128x256xbf16>, vector<256x512xbf16>, vector<128x512xf32> -> vector<128x512xf32>
    %4 = vector.extract_strided_slice %3 {offsets = [0, 0], sizes = [128, 256], strides = [1, 1]} : vector<128x512xf32> to vector<128x256xf32>
    %5 = vector.extract_strided_slice %3 {offsets = [0, 256], sizes = [128, 256], strides = [1, 1]} : vector<128x512xf32> to vector<128x256xf32>
    %6 = arith.mulf %4, %4 : vector<128x256xf32>
    %7 = arith.mulf %5, %5 : vector<128x256xf32>
    %8 = arith.addf %6, %7 : vector<128x256xf32>
    %9 = math.sqrt %8 : vector<128x256xf32>
    %cst_3 = arith.constant dense<0xFF800000> : vector<128xf32>
    %10 = vector.multi_reduction <maximumf>, %9, %cst_3 [1] : vector<128x256xf32> to vector<128xf32>
    %11 = vector.shape_cast %10 : vector<128xf32> to vector<128x1xf32>
    %cst_4 = arith.constant dense<0xFF800000> : vector<1xf32>
    %12 = vector.multi_reduction <maximumf>, %11, %cst_4 [0] : vector<128x1xf32> to vector<1xf32>
    %13 = vector.shape_cast %12 : vector<1xf32> to vector<1x1xf32>
    %cst_5 = arith.constant 1.000000e+00 : f32
    %14 = vector.broadcast %cst_5 : f32 to vector<1x1xf32>
    %15 = arith.divf %14, %13 : vector<1x1xf32>
    %16 = vector.broadcast %15 : vector<1x1xf32> to vector<128x256xf32>
    %17 = arith.mulf %9, %16 : vector<128x256xf32>
    %18 = tpu.iota {dimensions = array<i32: 1>} : vector<128x256xi32>
    %c2 = arith.constant 2 : index
    %19 = memref.load %arg3[%c2] : memref<5xf32, #tpu.memory_space<smem>>
    %20 = vector.broadcast %19 : f32 to vector<128x256xf32>
    %21 = arith.mulf %20, %17 : vector<128x256xf32>
    %c2_i32 = arith.constant 2 : i32
    %22 = tpu.dynamic_rotate %17 by %c2_i32 dim 1 : vector<128x256xf32>, i32 -> vector<128x256xf32>
    %c-2_i32 = arith.constant -2 : i32
    %23 = vector.broadcast %c-2_i32 : i32 to vector<128x256xi32>
    %24 = arith.addi %18, %23 : vector<128x256xi32>
    %c0_i32 = arith.constant 0 : i32
    %25 = vector.broadcast %c0_i32 : i32 to vector<128x256xi32>
    %26 = arith.cmpi sge, %24, %25 : vector<128x256xi32>
    %c-2_i32_6 = arith.constant -2 : i32
    %27 = vector.broadcast %c-2_i32_6 : i32 to vector<128x256xi32>
    %28 = arith.addi %18, %27 : vector<128x256xi32>
    %c256_i32 = arith.constant 256 : i32
    %29 = vector.broadcast %c256_i32 : i32 to vector<128x256xi32>
    %30 = arith.cmpi slt, %28, %29 : vector<128x256xi32>
    %31 = arith.andi %26, %30 : vector<128x256xi1>
    %c0_7 = arith.constant 0 : index
    %32 = memref.load %arg3[%c0_7] : memref<5xf32, #tpu.memory_space<smem>>
    %cst_8 = arith.constant 0.000000e+00 : f32
    %33 = vector.broadcast %cst_8 : f32 to vector<128x256xf32>
    %34 = arith.select %31, %22, %33 : vector<128x256xi1>, vector<128x256xf32>
    %35 = vector.broadcast %32 : f32 to vector<128x256xf32>
    %36 = arith.mulf %35, %34 : vector<128x256xf32>
    %37 = arith.addf %21, %36 : vector<128x256xf32>
    %c1_i32 = arith.constant 1 : i32
    %38 = tpu.dynamic_rotate %17 by %c1_i32 dim 1 : vector<128x256xf32>, i32 -> vector<128x256xf32>
    %c-1_i32 = arith.constant -1 : i32
    %39 = vector.broadcast %c-1_i32 : i32 to vector<128x256xi32>
    %40 = arith.addi %18, %39 : vector<128x256xi32>
    %c0_i32_9 = arith.constant 0 : i32
    %41 = vector.broadcast %c0_i32_9 : i32 to vector<128x256xi32>
    %42 = arith.cmpi sge, %40, %41 : vector<128x256xi32>
    %c-1_i32_10 = arith.constant -1 : i32
    %43 = vector.broadcast %c-1_i32_10 : i32 to vector<128x256xi32>
    %44 = arith.addi %18, %43 : vector<128x256xi32>
    %c256_i32_11 = arith.constant 256 : i32
    %45 = vector.broadcast %c256_i32_11 : i32 to vector<128x256xi32>
    %46 = arith.cmpi slt, %44, %45 : vector<128x256xi32>
    %47 = arith.andi %42, %46 : vector<128x256xi1>
    %c1 = arith.constant 1 : index
    %48 = memref.load %arg3[%c1] : memref<5xf32, #tpu.memory_space<smem>>
    %cst_12 = arith.constant 0.000000e+00 : f32
    %49 = vector.broadcast %cst_12 : f32 to vector<128x256xf32>
    %50 = arith.select %47, %38, %49 : vector<128x256xi1>, vector<128x256xf32>
    %51 = vector.broadcast %48 : f32 to vector<128x256xf32>
    %52 = arith.mulf %51, %50 : vector<128x256xf32>
    %53 = arith.addf %37, %52 : vector<128x256xf32>
    %c255_i32 = arith.constant 255 : i32
    %54 = tpu.dynamic_rotate %17 by %c255_i32 dim 1 : vector<128x256xf32>, i32 -> vector<128x256xf32>
    %c1_i32_13 = arith.constant 1 : i32
    %55 = vector.broadcast %c1_i32_13 : i32 to vector<128x256xi32>
    %56 = arith.addi %18, %55 : vector<128x256xi32>
    %c0_i32_14 = arith.constant 0 : i32
    %57 = vector.broadcast %c0_i32_14 : i32 to vector<128x256xi32>
    %58 = arith.cmpi sge, %56, %57 : vector<128x256xi32>
    %c1_i32_15 = arith.constant 1 : i32
    %59 = vector.broadcast %c1_i32_15 : i32 to vector<128x256xi32>
    %60 = arith.addi %18, %59 : vector<128x256xi32>
    %c256_i32_16 = arith.constant 256 : i32
    %61 = vector.broadcast %c256_i32_16 : i32 to vector<128x256xi32>
    %62 = arith.cmpi slt, %60, %61 : vector<128x256xi32>
    %63 = arith.andi %58, %62 : vector<128x256xi1>
    %c3 = arith.constant 3 : index
    %64 = memref.load %arg3[%c3] : memref<5xf32, #tpu.memory_space<smem>>
    %cst_17 = arith.constant 0.000000e+00 : f32
    %65 = vector.broadcast %cst_17 : f32 to vector<128x256xf32>
    %66 = arith.select %63, %54, %65 : vector<128x256xi1>, vector<128x256xf32>
    %67 = vector.broadcast %64 : f32 to vector<128x256xf32>
    %68 = arith.mulf %67, %66 : vector<128x256xf32>
    %69 = arith.addf %53, %68 : vector<128x256xf32>
    %c254_i32 = arith.constant 254 : i32
    %70 = tpu.dynamic_rotate %17 by %c254_i32 dim 1 : vector<128x256xf32>, i32 -> vector<128x256xf32>
    %c2_i32_18 = arith.constant 2 : i32
    %71 = vector.broadcast %c2_i32_18 : i32 to vector<128x256xi32>
    %72 = arith.addi %18, %71 : vector<128x256xi32>
    %c0_i32_19 = arith.constant 0 : i32
    %73 = vector.broadcast %c0_i32_19 : i32 to vector<128x256xi32>
    %74 = arith.cmpi sge, %72, %73 : vector<128x256xi32>
    %c2_i32_20 = arith.constant 2 : i32
    %75 = vector.broadcast %c2_i32_20 : i32 to vector<128x256xi32>
    %76 = arith.addi %18, %75 : vector<128x256xi32>
    %c256_i32_21 = arith.constant 256 : i32
    %77 = vector.broadcast %c256_i32_21 : i32 to vector<128x256xi32>
    %78 = arith.cmpi slt, %76, %77 : vector<128x256xi32>
    %79 = arith.andi %74, %78 : vector<128x256xi1>
    %c4 = arith.constant 4 : index
    %80 = memref.load %arg3[%c4] : memref<5xf32, #tpu.memory_space<smem>>
    %cst_22 = arith.constant 0.000000e+00 : f32
    %81 = vector.broadcast %cst_22 : f32 to vector<128x256xf32>
    %82 = arith.select %79, %70, %81 : vector<128x256xi1>, vector<128x256xf32>
    %83 = vector.broadcast %80 : f32 to vector<128x256xf32>
    %84 = arith.mulf %83, %82 : vector<128x256xf32>
    %85 = arith.addf %69, %84 : vector<128x256xf32>
    %c0_23 = arith.constant 0 : index
    %86 = memref.load %arg4[%c0_23] : memref<1xf32, #tpu.memory_space<smem>>
    %87 = vector.broadcast %86 : f32 to vector<128x256xf32>
    %88 = arith.addf %85, %87 : vector<128x256xf32>
    %cst_24 = arith.constant 0.000000e+00 : f32
    %89 = vector.broadcast %cst_24 : f32 to vector<128x256xf32>
    %90 = arith.maximumf %88, %89 : vector<128x256xf32>
    %c255_i32_25 = arith.constant 255 : i32
    %91 = tpu.dynamic_rotate %90 by %c255_i32_25 dim 1 : vector<128x256xf32>, i32 -> vector<128x256xf32>
    %92 = arith.maximumf %90, %91 : vector<128x256xf32>
    %93 = arith.truncf %92 : vector<128x256xf32> to vector<128x256xbf16>
    %c0_26 = arith.constant 0 : index
    %c0_27 = arith.constant 0 : index
    %94 = vector.load %arg5[%c0_26, %c0_27] : memref<256x128xbf16, #tpu.memory_space<vmem>>, vector<256x128xbf16>
    %cst_28 = arith.constant dense<0.000000e+00> : vector<128x128xf32>
    %95 = tpu.matmul %93, %94, %cst_28 {dimension_numbers = #tpu.dot_dimension_numbers<[1], [0], [0], [1], [0, 0, 1, 1], [], []>} : vector<128x256xbf16>, vector<256x128xbf16>, vector<128x128xf32> -> vector<128x128xf32>
    %c0_29 = arith.constant 0 : index
    %c0_30 = arith.constant 0 : index
    %96 = vector.load %arg6[%c0_29, %c0_30] : memref<1x128xf32, #tpu.memory_space<vmem>>, vector<1x128xf32>
    %97 = vector.broadcast %96 : vector<1x128xf32> to vector<128x128xf32>
    %98 = arith.addf %95, %97 : vector<128x128xf32>
    %cst_31 = arith.constant 0.000000e+00 : f32
    %99 = vector.broadcast %cst_31 : f32 to vector<128x128xf32>
    %100 = arith.maximumf %98, %99 : vector<128x128xf32>
    %101 = arith.truncf %100 : vector<128x128xf32> to vector<128x128xbf16>
    %c0_32 = arith.constant 0 : index
    %c0_33 = arith.constant 0 : index
    %102 = vector.load %arg7[%c0_32, %c0_33] : memref<128x128xbf16, #tpu.memory_space<vmem>>, vector<128x128xbf16>
    %cst_34 = arith.constant dense<0.000000e+00> : vector<128x128xf32>
    %103 = tpu.matmul %101, %102, %cst_34 {dimension_numbers = #tpu.dot_dimension_numbers<[1], [0], [0], [1], [0, 0, 1, 1], [], []>} : vector<128x128xbf16>, vector<128x128xbf16>, vector<128x128xf32> -> vector<128x128xf32>
    %c0_35 = arith.constant 0 : index
    %c0_36 = arith.constant 0 : index
    %104 = vector.load %arg8[%c0_35, %c0_36] : memref<1x128xf32, #tpu.memory_space<vmem>>, vector<1x128xf32>
    %105 = vector.broadcast %104 : vector<1x128xf32> to vector<128x128xf32>
    %106 = arith.addf %103, %105 : vector<128x128xf32>
    %cst_37 = arith.constant 0.000000e+00 : f32
    %107 = vector.broadcast %cst_37 : f32 to vector<128x128xf32>
    %108 = arith.maximumf %106, %107 : vector<128x128xf32>
    %c0_38 = arith.constant 0 : index
    %c0_39 = arith.constant 0 : index
    %109 = vector.load %arg9[%c0_38, %c0_39] : memref<128x128xf32, #tpu.memory_space<vmem>>, vector<128x128xf32>
    tpu.vector_store %arg9[%c0_38, %c0_39], %108 {strides = array<i32>} : memref<128x128xf32, #tpu.memory_space<vmem>>, vector<128x128xf32>,
    return
  }
  func.func @transform_0(%arg0: i32) -> (i32, i32) {
    %c0_i32 = arith.constant 0 : i32
    %c0_i32_0 = arith.constant 0 : i32
    return %arg0, %c0_i32 : i32, i32
  }
  func.func @transform_1(%arg0: i32) -> (i32, i32) {
    %c0_i32 = arith.constant 0 : i32
    %c0_i32_0 = arith.constant 0 : i32
    %c0_i32_1 = arith.constant 0 : i32
    return %c0_i32, %c0_i32_0 : i32, i32
  }
  func.func @transform_2(%arg0: i32) -> i32 {
    %c0_i32 = arith.constant 0 : i32
    %c0_i32_0 = arith.constant 0 : i32
    return %c0_i32 : i32
  }
  func.func @transform_3(%arg0: i32) -> i32 {
    %c0_i32 = arith.constant 0 : i32
    %c0_i32_0 = arith.constant 0 : i32
    return %c0_i32 : i32
  }
  func.func @transform_4(%arg0: i32) -> (i32, i32) {
    %c0_i32 = arith.constant 0 : i32
    %c0_i32_0 = arith.constant 0 : i32
    %c0_i32_1 = arith.constant 0 : i32
    return %c0_i32, %c0_i32_0 : i32, i32
  }
  func.func @transform_5(%arg0: i32) -> (i32, i32) {
    %c0_i32 = arith.constant 0 : i32
    %c0_i32_0 = arith.constant 0 : i32
    %c0_i32_1 = arith.constant 0 : i32
    return %c0_i32, %c0_i32_0 : i32, i32
  }
  func.func @transform_6(%arg0: i32) -> (i32, i32) {
    %c0_i32 = arith.constant 0 : i32
    %c0_i32_0 = arith.constant 0 : i32
    %c0_i32_1 = arith.constant 0 : i32
    return %c0_i32, %c0_i32_0 : i32, i32
  }
  func.func @transform_7(%arg0: i32) -> (i32, i32) {
    %c0_i32 = arith.constant 0 : i32
    %c0_i32_0 = arith.constant 0 : i32
    %c0_i32_1 = arith.constant 0 : i32
    return %c0_i32, %c0_i32_0 : i32, i32
  }
  func.func @transform_8(%arg0: i32) -> (i32, i32) {
    %c0_i32 = arith.constant 0 : i32
    %c0_i32_0 = arith.constant 0 : i32
    return %arg0, %c0_i32 : i32, i32
  }
}

</mosaic_0001>

<llo_original>
// kernel: model4_forward.1
$region0: #{model4_forward.1}
  #allocation0 [shape = 'u32[]', space=smem, size = 0x4, offset = 0x4, fixed_abs, tag = 'smem constant byte address 0x4 - core index']
  #allocation1 [shape = 'u32[72,128]{1,0:T(1,128)}', space=vmem, size = 0x9000, scoped, tag = 'internal scratch']
  #allocation2 [shape = 'f32[1]{0:T(128)S(6)}', space=smem, size = 0x200, scoped, tag = 'scoped memory for model4_forward.1']
  %s0 = inlined_call_operand.vmem [shape: f32[128,256], index: 0, kind: input, shape index: {}]
  %s1 = inlined_call_operand.hbm [shape: bf16[256,512], index: 1, kind: input, shape index: {}]
  %s2 = inlined_call_operand.vmem [shape: f32[5], index: 2, kind: input, shape index: {}]
  %s3 = inlined_call_operand.<no memory space> [shape: f32[1], index: 3, kind: input, shape index: {}]
  %s4 = inlined_call_operand.vmem [shape: bf16[256,128], index: 4, kind: input, shape index: {}]
  %s5 = inlined_call_operand.vmem [shape: f32[1,128], index: 5, kind: input, shape index: {}]
  %s6 = inlined_call_operand.vmem [shape: bf16[128,128], index: 6, kind: input, shape index: {}]
  %s7 = inlined_call_operand.vmem [shape: f32[1,128], index: 7, kind: input, shape index: {}]
  %s8 = inlined_call_operand.vmem [shape: f32[128,128], index: 8, kind: output, shape index: {}]
  %s9 = sld [smem:[#allocation0]]
  $region50: #{model4_forward.1} parent=0
    _
  %s11 = ssub.s32 1, %s9
  %s12 = scalar_select 0, %s11, %s9
  %13 = sst [smem:[#allocation2]] %s3
  $region1: #{model4_forward.1} parent=0
    #allocation3 [shape = 'u8[262144]{0}', space=vmem, size = 0x40000, scoped, tag = 'input window, operand 1, single buffered']
    #allocation4 [shape = 's32[1]{0}', space=sflag, size = 0x4, scoped, tag = 'scoped memory for model4_forward.1']
    #allocation5 [shape = 's32[1]{0}', space=sflag, size = 0x4, scoped, tag = 'scoped memory for model4_forward.1']
    #allocation6 [shape = 'u8[512]{0}', space=smem, size = 0x200, scoped, tag = 'input window, operand 2, single buffered']
    %14 = vsyncpa [#allocation4], 0
    %15 = vsyncpa [#allocation5], 0
    // Predicated region
    $region2: #{model4_forward.1} parent=1 // pred_check
      _
    $region3: #{model4_forward.1} parent=1 // pred_check_branch
      %17 = sbr.rel (0) target = $region5
    $region4: #{model4_forward.1} parent=1 // pred_region
      _
    $region5: #{model4_forward.1} parent=1 // pred_fallthru
      _
    // Predicated region
    $region6: #{model4_forward.1} parent=1 // pred_check
      _
    $region7: #{model4_forward.1} parent=1 // pred_check_branch
      %19 = sbr.rel (0) target = $region9
    $region8: #{model4_forward.1} parent=1 // pred_region
      %21 = vsyncadd [#allocation4], 0
      %s22 = sshll.u32 %s1, 4
      %s23 = int_to_ptr.hbm [resolvable:$true] %s22
      %s24 = sshll.u32 [#allocation3], 4
      %s25 = int_to_ptr.vmem [resolvable:$true] %s24
      %30 = dma.hbm_to_vmem [thread:$0]  %s23, 8192, %s25, [#allocation4], 256, 256, 16
    $region9: #{model4_forward.1} parent=1 // pred_fallthru
      _
    // Predicated region
    $region10: #{model4_forward.1} parent=1 // pred_check
      _
    $region11: #{model4_forward.1} parent=1 // pred_check_branch
      %32 = sbr.rel (0) target = $region13
    $region12: #{model4_forward.1} parent=1 // pred_region
      %34 = vsyncadd [#allocation5], 0
      %s36 = sshll.u32 %s2, 4
      %s37 = int_to_ptr.vmem [resolvable:$true] %s36
      %39 = dma.vmem_to_smem %s37, 16, [#allocation6], [#allocation5]
    $region13: #{model4_forward.1} parent=1 // pred_fallthru
      _
    // Predicated region
    $region14: #{model4_forward.1} parent=1 // pred_check
      _
    $region15: #{model4_forward.1} parent=1 // pred_check_branch
      %41 = sbr.rel (0) target = $region17
    $region16: #{model4_forward.1} parent=1 // pred_region
      _
    $region17: #{model4_forward.1} parent=1 // pred_fallthru
      _
    // Predicated region
    $region18: #{model4_forward.1} parent=1 // pred_check
      _
    $region19: #{model4_forward.1} parent=1 // pred_check_branch
      %43 = sbr.rel (0) target = $region21
    $region20: #{model4_forward.1} parent=1 // pred_region
      _
    $region21: #{model4_forward.1} parent=1 // pred_fallthru
      _
    // Predicated region
    $region22: #{model4_forward.1} parent=1 // pred_check
      _
    $region23: #{model4_forward.1} parent=1 // pred_check_branch
      %45 = sbr.rel (0) target = $region25
    $region24: #{model4_forward.1} parent=1 // pred_region
      _
    $region25: #{model4_forward.1} parent=1 // pred_fallthru
      _
    // Predicated region
    $region26: #{model4_forward.1} parent=1 // pred_check
      _
    $region27: #{model4_forward.1} parent=1 // pred_check_branch
      %47 = sbr.rel (0) target = $region29
    $region28: #{model4_forward.1} parent=1 // pred_region
      _
    $region29: #{model4_forward.1} parent=1 // pred_fallthru
      _
    // Predicated region
    $region30: #{model4_forward.1} parent=1 // pred_check
      _
    $region31: #{model4_forward.1} parent=1 // pred_check_branch
      %49 = sbr.rel (0) target = $region33
    $region32: #{model4_forward.1} parent=1 // pred_region
      _
    $region33: #{model4_forward.1} parent=1 // pred_fallthru
      _
    // Predicated region
    $region34: #{model4_forward.1} parent=1 // pred_check
      _
    $region35: #{model4_forward.1} parent=1 // pred_check_branch
      %51 = sbr.rel (0) target = $region37
    $region36: #{model4_forward.1} parent=1 // pred_region
      %53 = dma.done [#allocation4], 8192
    $region37: #{model4_forward.1} parent=1 // pred_fallthru
      _
    // Predicated region
    $region38: #{model4_forward.1} parent=1 // pred_check
      _
    $region39: #{model4_forward.1} parent=1 // pred_check_branch
      %55 = sbr.rel (0) target = $region41
    $region40: #{model4_forward.1} parent=1 // pred_region
      %57 = dma.done [#allocation5], 16
    $region41: #{model4_forward.1} parent=1 // pred_fallthru
      _
    %58 = sfence
    %v59 = vld [vmem:[%s0] sm:$0xff]
    %v60 = vld [vmem:[%s0 + $0x8] sm:$0xff]
    %v61 = vld [vmem:[%s0 + $0x10] sm:$0xff]
    %v62 = vld [vmem:[%s0 + $0x18] sm:$0xff]
    %v63 = vld [vmem:[%s0 + $0x20] sm:$0xff]
    %v64 = vld [vmem:[%s0 + $0x28] sm:$0xff]
    %v65 = vld [vmem:[%s0 + $0x30] sm:$0xff]
    %v66 = vld [vmem:[%s0 + $0x38] sm:$0xff]
    %v67 = vld [vmem:[%s0 + $0x40] sm:$0xff]
    %v68 = vld [vmem:[%s0 + $0x48] sm:$0xff]
    %v69 = vld [vmem:[%s0 + $0x50] sm:$0xff]
    %v70 = vld [vmem:[%s0 + $0x58] sm:$0xff]
    %v71 = vld [vmem:[%s0 + $0x60] sm:$0xff]
    %v72 = vld [vmem:[%s0 + $0x68] sm:$0xff]
    %v73 = vld [vmem:[%s0 + $0x70] sm:$0xff]
    %v74 = vld [vmem:[%s0 + $0x78] sm:$0xff]
    %v75 = vld [vmem:[%s0 + $0x80] sm:$0xff]
    %v76 = vld [vmem:[%s0 + $0x88] sm:$0xff]
    %v77 = vld [vmem:[%s0 + $0x90] sm:$0xff]
    %v78 = vld [vmem:[%s0 + $0x98] sm:$0xff]
    %v79 = vld [vmem:[%s0 + $0xa0] sm:$0xff]
    %v80 = vld [vmem:[%s0 + $0xa8] sm:$0xff]
    %v81 = vld [vmem:[%s0 + $0xb0] sm:$0xff]
    %v82 = vld [vmem:[%s0 + $0xb8] sm:$0xff]
    %v83 = vld [vmem:[%s0 + $0xc0] sm:$0xff]
    %v84 = vld [vmem:[%s0 + $0xc8] sm:$0xff]
    %v85 = vld [vmem:[%s0 + $0xd0] sm:$0xff]
    %v86 = vld [vmem:[%s0 + $0xd8] sm:$0xff]
    %v87 = vld [vmem:[%s0 + $0xe0] sm:$0xff]
    %v88 = vld [vmem:[%s0 + $0xe8] sm:$0xff]
    %v89 = vld [vmem:[%s0 + $0xf0] sm:$0xff]
    %v90 = vld [vmem:[%s0 + $0xf8] sm:$0xff]
    %v91 = vpack.c.bf16 %v61, %v59
    %v92 = vpack.c.bf16 %v62, %v60
    %v93 = vpack.c.bf16 %v65, %v63
    %v94 = vpack.c.bf16 %v66, %v64
    %v95 = vpack.c.bf16 %v69, %v67
    %v96 = vpack.c.bf16 %v70, %v68
    %v97 = vpack.c.bf16 %v73, %v71
    %v98 = vpack.c.bf16 %v74, %v72
    %v99 = vpack.c.bf16 %v77, %v75
    %v100 = vpack.c.bf16 %v78, %v76
    %v101 = vpack.c.bf16 %v81, %v79
    %v102 = vpack.c.bf16 %v82, %v80
    %v103 = vpack.c.bf16 %v85, %v83
    %v104 = vpack.c.bf16 %v86, %v84
    %v105 = vpack.c.bf16 %v89, %v87
    %v106 = vpack.c.bf16 %v90, %v88
    %v107 = vld [vmem:[#allocation3] sm:$0xff]
    %v108 = vld [vmem:[#allocation3 + $0x8] sm:$0xff]
    %v109 = vld [vmem:[#allocation3 + $0x10] sm:$0xff]
    %v110 = vld [vmem:[#allocation3 + $0x18] sm:$0xff]
    %v111 = vld [vmem:[#allocation3 + $0x20] sm:$0xff]
    %v112 = vld [vmem:[#allocation3 + $0x28] sm:$0xff]
    %v113 = vld [vmem:[#allocation3 + $0x30] sm:$0xff]
    %v114 = vld [vmem:[#allocation3 + $0x38] sm:$0xff]
    %v115 = vld [vmem:[#allocation3 + $0x40] sm:$0xff]
    %v116 = vld [vmem:[#allocation3 + $0x48] sm:$0xff]
    %v117 = vld [vmem:[#allocation3 + $0x50] sm:$0xff]
    %v118 = vld [vmem:[#allocation3 + $0x58] sm:$0xff]
    %v119 = vld [vmem:[#allocation3 + $0x60] sm:$0xff]
    %v120 = vld [vmem:[#allocation3 + $0x68] sm:$0xff]
    %v121 = vld [vmem:[#allocation3 + $0x70] sm:$0xff]
    %v122 = vld [vmem:[#allocation3 + $0x78] sm:$0xff]
    %v123 = vld [vmem:[#allocation3 + $0x80] sm:$0xff]
    %v124 = vld [vmem:[#allocation3 + $0x88] sm:$0xff]
    %v125 = vld [vmem:[#allocation3 + $0x90] sm:$0xff]
    %v126 = vld [vmem:[#allocation3 + $0x98] sm:$0xff]
    %v127 = vld [vmem:[#allocation3 + $0xa0] sm:$0xff]
    %v128 = vld [vmem:[#allocation3 + $0xa8] sm:$0xff]
    %v129 = vld [vmem:[#allocation3 + $0xb0] sm:$0xff]
    %v130 = vld [vmem:[#allocation3 + $0xb8] sm:$0xff]
    %v131 = vld [vmem:[#allocation3 + $0xc0] sm:$0xff]
    %v132 = vld [vmem:[#allocation3 + $0xc8] sm:$0xff]
    %v133 = vld [vmem:[#allocation3 + $0xd0] sm:$0xff]
    %v134 = vld [vmem:[#allocation3 + $0xd8] sm:$0xff]
    %v135 = vld [vmem:[#allocation3 + $0xe0] sm:$0xff]
    %v136 = vld [vmem:[#allocation3 + $0xe8] sm:$0xff]
    %v137 = vld [vmem:[#allocation3 + $0xf0] sm:$0xff]
    %v138 = vld [vmem:[#allocation3 + $0xf8] sm:$0xff]
    %v139 = vld [vmem:[#allocation3 + $0x100] sm:$0xff]
    %v140 = vld [vmem:[#allocation3 + $0x108] sm:$0xff]
    %v141 = vld [vmem:[#allocation3 + $0x110] sm:$0xff]
    %v142 = vld [vmem:[#allocation3 + $0x118] sm:$0xff]
    %v143 = vld [vmem:[#allocation3 + $0x120] sm:$0xff]
    %v144 = vld [vmem:[#allocation3 + $0x128] sm:$0xff]
    %v145 = vld [vmem:[#allocation3 + $0x130] sm:$0xff]
    %v146 = vld [vmem:[#allocation3 + $0x138] sm:$0xff]
    %v147 = vld [vmem:[#allocation3 + $0x140] sm:$0xff]
    %v148 = vld [vmem:[#allocation3 + $0x148] sm:$0xff]
    %v149 = vld [vmem:[#allocation3 + $0x150] sm:$0xff]
    %v150 = vld [vmem:[#allocation3 + $0x158] sm:$0xff]
    %v151 = vld [vmem:[#allocation3 + $0x160] sm:$0xff]
    %v152 = vld [vmem:[#allocation3 + $0x168] sm:$0xff]
    %v153 = vld [vmem:[#allocation3 + $0x170] sm:$0xff]
    %v154 = vld [vmem:[#allocation3 + $0x178] sm:$0xff]
    %v155 = vld [vmem:[#allocation3 + $0x180] sm:$0xff]
    %v156 = vld [vmem:[#allocation3 + $0x188] sm:$0xff]
    %v157 = vld [vmem:[#allocation3 + $0x190] sm:$0xff]
    %v158 = vld [vmem:[#allocation3 + $0x198] sm:$0xff]
    %v159 = vld [vmem:[#allocation3 + $0x1a0] sm:$0xff]
    %v160 = vld [vmem:[#allocation3 + $0x1a8] sm:$0xff]
    %v161 = vld [vmem:[#allocation3 + $0x1b0] sm:$0xff]
    %v162 = vld [vmem:[#allocation3 + $0x1b8] sm:$0xff]
    %v163 = vld [vmem:[#allocation3 + $0x1c0] sm:$0xff]
    %v164 = vld [vmem:[#allocation3 + $0x1c8] sm:$0xff]
    %v165 = vld [vmem:[#allocation3 + $0x1d0] sm:$0xff]
    %v166 = vld [vmem:[#allocation3 + $0x1d8] sm:$0xff]
    %v167 = vld [vmem:[#allocation3 + $0x1e0] sm:$0xff]
    %v168 = vld [vmem:[#allocation3 + $0x1e8] sm:$0xff]
    %v169 = vld [vmem:[#allocation3 + $0x1f0] sm:$0xff]
    %v170 = vld [vmem:[#allocation3 + $0x1f8] sm:$0xff]
    %v235 = vunpack.c.l.b16 %v107
    %v236 = vunpack.c.h.b16 %v107
    %v237 = vunpack.c.l.b16 %v108
    %v238 = vunpack.c.h.b16 %v108
    %v239 = vunpack.c.l.b16 %v109
    %v240 = vunpack.c.h.b16 %v109
    %v241 = vunpack.c.l.b16 %v110
    %v242 = vunpack.c.h.b16 %v110
    %v243 = vunpack.c.l.b16 %v111
    %v244 = vunpack.c.h.b16 %v111
    %v245 = vunpack.c.l.b16 %v112
    %v246 = vunpack.c.h.b16 %v112
    %v247 = vunpack.c.l.b16 %v113
    %v248 = vunpack.c.h.b16 %v113
    %v249 = vunpack.c.l.b16 %v114
    %v250 = vunpack.c.h.b16 %v114
    %v251 = vunpack.c.l.b16 %v115
    %v252 = vunpack.c.h.b16 %v115
    %v253 = vunpack.c.l.b16 %v116
    %v254 = vunpack.c.h.b16 %v116
    %v255 = vunpack.c.l.b16 %v117
    %v256 = vunpack.c.h.b16 %v117
    %v257 = vunpack.c.l.b16 %v118
    %v258 = vunpack.c.h.b16 %v118
    %v259 = vunpack.c.l.b16 %v119
    %v260 = vunpack.c.h.b16 %v119
    %v261 = vunpack.c.l.b16 %v120
    %v262 = vunpack.c.h.b16 %v120
    %v263 = vunpack.c.l.b16 %v121
    %v264 = vunpack.c.h.b16 %v121
    %v265 = vunpack.c.l.b16 %v122
    %v266 = vunpack.c.h.b16 %v122
    %v267 = vunpack.c.l.b16 %v123
    %v268 = vunpack.c.h.b16 %v123
    %v269 = vunpack.c.l.b16 %v124
    %v270 = vunpack.c.h.b16 %v124
    %v271 = vunpack.c.l.b16 %v125
    %v272 = vunpack.c.h.b16 %v125
    %v273 = vunpack.c.l.b16 %v126
    %v274 = vunpack.c.h.b16 %v126
    %v275 = vunpack.c.l.b16 %v127
    %v276 = vunpack.c.h.b16 %v127
    %v277 = vunpack.c.l.b16 %v128
    %v278 = vunpack.c.h.b16 %v128
    %v279 = vunpack.c.l.b16 %v129
    %v280 = vunpack.c.h.b16 %v129
    %v281 = vunpack.c.l.b16 %v130
    %v282 = vunpack.c.h.b16 %v130
    %v283 = vunpack.c.l.b16 %v131
    %v284 = vunpack.c.h.b16 %v131
    %v285 = vunpack.c.l.b16 %v132
    %v286 = vunpack.c.h.b16 %v132
    %v287 = vunpack.c.l.b16 %v133
    %v288 = vunpack.c.h.b16 %v133
    %v289 = vunpack.c.l.b16 %v134
    %v290 = vunpack.c.h.b16 %v134
    %v291 = vunpack.c.l.b16 %v135
    %v292 = vunpack.c.h.b16 %v135
    %v293 = vunpack.c.l.b16 %v136
    %v294 = vunpack.c.h.b16 %v136
    %v295 = vunpack.c.l.b16 %v137
    %v296 = vunpack.c.h.b16 %v137
    %v297 = vunpack.c.l.b16 %v138
    %v298 = vunpack.c.h.b16 %v138
    %v299 = vunpack.c.l.b16 %v139
    %v300 = vunpack.c.h.b16 %v139
    %v301 = vunpack.c.l.b16 %v140
    %v302 = vunpack.c.h.b16 %v140
    %v303 = vunpack.c.l.b16 %v141
    %v304 = vunpack.c.h.b16 %v141
    %v305 = vunpack.c.l.b16 %v142
    %v306 = vunpack.c.h.b16 %v142
    %v307 = vunpack.c.l.b16 %v143
    %v308 = vunpack.c.h.b16 %v143
    %v309 = vunpack.c.l.b16 %v144
    %v310 = vunpack.c.h.b16 %v144
    %v311 = vunpack.c.l.b16 %v145
    %v312 = vunpack.c.h.b16 %v145
    %v313 = vunpack.c.l.b16 %v146
    %v314 = vunpack.c.h.b16 %v146
    %v315 = vunpack.c.l.b16 %v147
    %v316 = vunpack.c.h.b16 %v147
    %v317 = vunpack.c.l.b16 %v148
    %v318 = vunpack.c.h.b16 %v148
    %v319 = vunpack.c.l.b16 %v149
    %v320 = vunpack.c.h.b16 %v149
    %v321 = vunpack.c.l.b16 %v150
    %v322 = vunpack.c.h.b16 %v150
    %v323 = vunpack.c.l.b16 %v151
    %v324 = vunpack.c.h.b16 %v151
    %v325 = vunpack.c.l.b16 %v152
    %v326 = vunpack.c.h.b16 %v152
    %v327 = vunpack.c.l.b16 %v153
    %v328 = vunpack.c.h.b16 %v153
    %v329 = vunpack.c.l.b16 %v154
    %v330 = vunpack.c.h.b16 %v154
    %v331 = vunpack.c.l.b16 %v155
    %v332 = vunpack.c.h.b16 %v155
    %v333 = vunpack.c.l.b16 %v156
    %v334 = vunpack.c.h.b16 %v156
    %v335 = vunpack.c.l.b16 %v157
    %v336 = vunpack.c.h.b16 %v157
    %v337 = vunpack.c.l.b16 %v158
    %v338 = vunpack.c.h.b16 %v158
    %v339 = vunpack.c.l.b16 %v159
    %v340 = vunpack.c.h.b16 %v159
    %v341 = vunpack.c.l.b16 %v160
    %v342 = vunpack.c.h.b16 %v160
    %v343 = vunpack.c.l.b16 %v161
    %v344 = vunpack.c.h.b16 %v161
    %v345 = vunpack.c.l.b16 %v162
    %v346 = vunpack.c.h.b16 %v162
    %v347 = vunpack.c.l.b16 %v163
    %v348 = vunpack.c.h.b16 %v163
    %v349 = vunpack.c.l.b16 %v164
    %v350 = vunpack.c.h.b16 %v164
    %v351 = vunpack.c.l.b16 %v165
    %v352 = vunpack.c.h.b16 %v165
    %v353 = vunpack.c.l.b16 %v166
    %v354 = vunpack.c.h.b16 %v166
    %v355 = vunpack.c.l.b16 %v167
    %v356 = vunpack.c.h.b16 %v167
    %v357 = vunpack.c.l.b16 %v168
    %v358 = vunpack.c.h.b16 %v168
    %v359 = vunpack.c.l.b16 %v169
    %v360 = vunpack.c.h.b16 %v169
    %v361 = vunpack.c.l.b16 %v170
    %v362 = vunpack.c.h.b16 %v170
    %v363 = vpack.c.b16 %v239, %v235
    %v364 = vpack.c.b16 %v240, %v236
    %v365 = vpack.c.b16 %v241, %v237
    %v366 = vpack.c.b16 %v242, %v238
    %v367 = vpack.c.b16 %v247, %v243
    %v368 = vpack.c.b16 %v248, %v244
    %v369 = vpack.c.b16 %v249, %v245
    %v370 = vpack.c.b16 %v250, %v246
    %v371 = vpack.c.b16 %v255, %v251
    %v372 = vpack.c.b16 %v256, %v252
    %v373 = vpack.c.b16 %v257, %v253
    %v374 = vpack.c.b16 %v258, %v254
    %v375 = vpack.c.b16 %v263, %v259
    %v376 = vpack.c.b16 %v264, %v260
    %v377 = vpack.c.b16 %v265, %v261
    %v378 = vpack.c.b16 %v266, %v262
    %v379 = vpack.c.b16 %v271, %v267
    %v380 = vpack.c.b16 %v272, %v268
    %v381 = vpack.c.b16 %v273, %v269
    %v382 = vpack.c.b16 %v274, %v270
    %v383 = vpack.c.b16 %v279, %v275
    %v384 = vpack.c.b16 %v280, %v276
    %v385 = vpack.c.b16 %v281, %v277
    %v386 = vpack.c.b16 %v282, %v278
    %v387 = vpack.c.b16 %v287, %v283
    %v388 = vpack.c.b16 %v288, %v284
    %v389 = vpack.c.b16 %v289, %v285
    %v390 = vpack.c.b16 %v290, %v286
    %v391 = vpack.c.b16 %v295, %v291
    %v392 = vpack.c.b16 %v296, %v292
    %v393 = vpack.c.b16 %v297, %v293
    %v394 = vpack.c.b16 %v298, %v294
    %v395 = vpack.c.b16 %v303, %v299
    %v396 = vpack.c.b16 %v304, %v300
    %v397 = vpack.c.b16 %v305, %v301
    %v398 = vpack.c.b16 %v306, %v302
    %v399 = vpack.c.b16 %v311, %v307
    %v400 = vpack.c.b16 %v312, %v308
    %v401 = vpack.c.b16 %v313, %v309
    %v402 = vpack.c.b16 %v314, %v310
    %v403 = vpack.c.b16 %v319, %v315
    %v404 = vpack.c.b16 %v320, %v316
    %v405 = vpack.c.b16 %v321, %v317
    %v406 = vpack.c.b16 %v322, %v318
    %v407 = vpack.c.b16 %v327, %v323
    %v408 = vpack.c.b16 %v328, %v324
    %v409 = vpack.c.b16 %v329, %v325
    %v410 = vpack.c.b16 %v330, %v326
    %v411 = vpack.c.b16 %v335, %v331
    %v412 = vpack.c.b16 %v336, %v332
    %v413 = vpack.c.b16 %v337, %v333
    %v414 = vpack.c.b16 %v338, %v334
    %v415 = vpack.c.b16 %v343, %v339
    %v416 = vpack.c.b16 %v344, %v340
    %v417 = vpack.c.b16 %v345, %v341
    %v418 = vpack.c.b16 %v346, %v342
    %v419 = vpack.c.b16 %v351, %v347
    %v420 = vpack.c.b16 %v352, %v348
    %v421 = vpack.c.b16 %v353, %v349
    %v422 = vpack.c.b16 %v354, %v350
    %v423 = vpack.c.b16 %v359, %v355
    %v424 = vpack.c.b16 %v360, %v356
    %v425 = vpack.c.b16 %v361, %v357
    %v426 = vpack.c.b16 %v362, %v358
    %491 = vmatpush.bf16.msra.mxu0 %v391
    %492 = vmatpush.bf16.msra.mxu0 %v387
    %493 = vmatpush.bf16.msra.mxu0 %v383
    %494 = vmatpush.bf16.msra.mxu0 %v379
    %495 = vmatpush.bf16.msra.mxu0 %v375
    %496 = vmatpush.bf16.msra.mxu0 %v371
    %497 = vmatpush.bf16.msra.mxu0 %v367
    %498 = vmatpush.bf16.msra.mxu0 %v363
    %499 = vmatmul.bf16.gmra.mxu0 %v91
    %v500 = vpop.f32.mrf.mxu0
    %v501 = vadd.f32 0.0, %v500
    %v502 = vpop.f32.mrf.mxu0
    %v503 = vadd.f32 0.0, %v502
    %504 = vmatmul.bf16.gmra.mxu0 %v93
    %v505 = vpop.f32.mrf.mxu0
    %v506 = vadd.f32 0.0, %v505
    %v507 = vpop.f32.mrf.mxu0
    %v508 = vadd.f32 0.0, %v507
    %509 = vmatmul.bf16.gmra.mxu0 %v95
    %v510 = vpop.f32.mrf.mxu0
    %v511 = vadd.f32 0.0, %v510
    %v512 = vpop.f32.mrf.mxu0
    %v513 = vadd.f32 0.0, %v512
    %514 = vmatmul.bf16.gmra.mxu0 %v97
    %v515 = vpop.f32.mrf.mxu0
    %v516 = vadd.f32 0.0, %v515
    %v517 = vpop.f32.mrf.mxu0
    %v518 = vadd.f32 0.0, %v517
    %519 = vmatmul.bf16.gmra.mxu0 %v99
    %v520 = vpop.f32.mrf.mxu0
    %v521 = vadd.f32 0.0, %v520
    %v522 = vpop.f32.mrf.mxu0
    %v523 = vadd.f32 0.0, %v522
    %524 = vmatmul.bf16.gmra.mxu0 %v101
    %v525 = vpop.f32.mrf.mxu0
    %v526 = vadd.f32 0.0, %v525
    %v527 = vpop.f32.mrf.mxu0
    %v528 = vadd.f32 0.0, %v527
    %529 = vmatmul.bf16.gmra.mxu0 %v103
    %v530 = vpop.f32.mrf.mxu0
    %v531 = vadd.f32 0.0, %v530
    %v532 = vpop.f32.mrf.mxu0
    %v533 = vadd.f32 0.0, %v532
    %534 = vmatmul.bf16.gmra.mxu0 %v105
    %v535 = vpop.f32.mrf.mxu0
    %v536 = vadd.f32 0.0, %v535
    %v537 = vpop.f32.mrf.mxu0
    %v538 = vadd.f32 0.0, %v537
    %539 = vdwg.mxu0
    %540 = vmatpush.bf16.msra.mxu0 %v423
    %541 = vmatpush.bf16.msra.mxu0 %v419
    %542 = vmatpush.bf16.msra.mxu0 %v415
    %543 = vmatpush.bf16.msra.mxu0 %v411
    %544 = vmatpush.bf16.msra.mxu0 %v407
    %545 = vmatpush.bf16.msra.mxu0 %v403
    %546 = vmatpush.bf16.msra.mxu0 %v399
    %547 = vmatpush.bf16.msra.mxu0 %v395
    %548 = vmatmul.bf16.gmra.mxu0 %v92
    %v549 = vpop.f32.mrf.mxu0
    %v550 = vadd.f32 %v501, %v549
    %v551 = vpop.f32.mrf.mxu0
    %v552 = vadd.f32 %v503, %v551
    %553 = vmatmul.bf16.gmra.mxu0 %v94
    %v554 = vpop.f32.mrf.mxu0
    %v555 = vadd.f32 %v506, %v554
    %v556 = vpop.f32.mrf.mxu0
    %v557 = vadd.f32 %v508, %v556
    %558 = vmatmul.bf16.gmra.mxu0 %v96
    %v559 = vpop.f32.mrf.mxu0
    %v560 = vadd.f32 %v511, %v559
    %v561 = vpop.f32.mrf.mxu0
    %v562 = vadd.f32 %v513, %v561
    %563 = vmatmul.bf16.gmra.mxu0 %v98
    %v564 = vpop.f32.mrf.mxu0
    %v565 = vadd.f32 %v516, %v564
    %v566 = vpop.f32.mrf.mxu0
    %v567 = vadd.f32 %v518, %v566
    %568 = vmatmul.bf16.gmra.mxu0 %v100
    %v569 = vpop.f32.mrf.mxu0
    %v570 = vadd.f32 %v521, %v569
    %v571 = vpop.f32.mrf.mxu0
    %v572 = vadd.f32 %v523, %v571
    %573 = vmatmul.bf16.gmra.mxu0 %v102
    %v574 = vpop.f32.mrf.mxu0
    %v575 = vadd.f32 %v526, %v574
    %v576 = vpop.f32.mrf.mxu0
    %v577 = vadd.f32 %v528, %v576
    %578 = vmatmul.bf16.gmra.mxu0 %v104
    %v579 = vpop.f32.mrf.mxu0
    %v580 = vadd.f32 %v531, %v579
    %v581 = vpop.f32.mrf.mxu0
    %v582 = vadd.f32 %v533, %v581
    %583 = vmatmul.bf16.gmra.mxu0 %v106
    %v584 = vpop.f32.mrf.mxu0
    %v585 = vadd.f32 %v536, %v584
    %v586 = vpop.f32.mrf.mxu0
    %v587 = vadd.f32 %v538, %v586
    %588 = vdwg.mxu0
    %589 = vmatpush.bf16.msra.mxu0 %v392
    %590 = vmatpush.bf16.msra.mxu0 %v388
    %591 = vmatpush.bf16.msra.mxu0 %v384
    %592 = vmatpush.bf16.msra.mxu0 %v380
    %593 = vmatpush.bf16.msra.mxu0 %v376
    %594 = vmatpush.bf16.msra.mxu0 %v372
    %595 = vmatpush.bf16.msra.mxu0 %v368
    %596 = vmatpush.bf16.msra.mxu0 %v364
    %597 = vmatmul.bf16.gmra.mxu0 %v91
    %v598 = vpop.f32.mrf.mxu0
    %v599 = vadd.f32 0.0, %v598
    %v600 = vpop.f32.mrf.mxu0
    %v601 = vadd.f32 0.0, %v600
    %602 = vmatmul.bf16.gmra.mxu0 %v93
    %v603 = vpop.f32.mrf.mxu0
    %v604 = vadd.f32 0.0, %v603
    %v605 = vpop.f32.mrf.mxu0
    %v606 = vadd.f32 0.0, %v605
    %607 = vmatmul.bf16.gmra.mxu0 %v95
    %v608 = vpop.f32.mrf.mxu0
    %v609 = vadd.f32 0.0, %v608
    %v610 = vpop.f32.mrf.mxu0
    %v611 = vadd.f32 0.0, %v610
    %612 = vmatmul.bf16.gmra.mxu0 %v97
    %v613 = vpop.f32.mrf.mxu0
    %v614 = vadd.f32 0.0, %v613
    %v615 = vpop.f32.mrf.mxu0
    %v616 = vadd.f32 0.0, %v615
    %617 = vmatmul.bf16.gmra.mxu0 %v99
    %v618 = vpop.f32.mrf.mxu0
    %v619 = vadd.f32 0.0, %v618
    %v620 = vpop.f32.mrf.mxu0
    %v621 = vadd.f32 0.0, %v620
    %622 = vmatmul.bf16.gmra.mxu0 %v101
    %v623 = vpop.f32.mrf.mxu0
    %v624 = vadd.f32 0.0, %v623
    %v625 = vpop.f32.mrf.mxu0
    %v626 = vadd.f32 0.0, %v625
    %627 = vmatmul.bf16.gmra.mxu0 %v103
    %v628 = vpop.f32.mrf.mxu0
    %v629 = vadd.f32 0.0, %v628
    %v630 = vpop.f32.mrf.mxu0
    %v631 = vadd.f32 0.0, %v630
    %632 = vmatmul.bf16.gmra.mxu0 %v105
    %v633 = vpop.f32.mrf.mxu0
    %v634 = vadd.f32 0.0, %v633
    %v635 = vpop.f32.mrf.mxu0
    %v636 = vadd.f32 0.0, %v635
    %637 = vdwg.mxu0
    %638 = vmatpush.bf16.msra.mxu0 %v424
    %639 = vmatpush.bf16.msra.mxu0 %v420
    %640 = vmatpush.bf16.msra.mxu0 %v416
    %641 = vmatpush.bf16.msra.mxu0 %v412
    %642 = vmatpush.bf16.msra.mxu0 %v408
    %643 = vmatpush.bf16.msra.mxu0 %v404
    %644 = vmatpush.bf16.msra.mxu0 %v400
    %645 = vmatpush.bf16.msra.mxu0 %v396
    %646 = vmatmul.bf16.gmra.mxu0 %v92
    %v647 = vpop.f32.mrf.mxu0
    %v648 = vadd.f32 %v599, %v647
    %v649 = vpop.f32.mrf.mxu0
    %v650 = vadd.f32 %v601, %v649
    %651 = vmatmul.bf16.gmra.mxu0 %v94
    %v652 = vpop.f32.mrf.mxu0
    %v653 = vadd.f32 %v604, %v652
    %v654 = vpop.f32.mrf.mxu0
    %v655 = vadd.f32 %v606, %v654
    %656 = vmatmul.bf16.gmra.mxu0 %v96
    %v657 = vpop.f32.mrf.mxu0
    %v658 = vadd.f32 %v609, %v657
    %v659 = vpop.f32.mrf.mxu0
    %v660 = vadd.f32 %v611, %v659
    %661 = vmatmul.bf16.gmra.mxu0 %v98
    %v662 = vpop.f32.mrf.mxu0
    %v663 = vadd.f32 %v614, %v662
    %v664 = vpop.f32.mrf.mxu0
    %v665 = vadd.f32 %v616, %v664
    %666 = vmatmul.bf16.gmra.mxu0 %v100
    %v667 = vpop.f32.mrf.mxu0
    %v668 = vadd.f32 %v619, %v667
    %v669 = vpop.f32.mrf.mxu0
    %v670 = vadd.f32 %v621, %v669
    %671 = vmatmul.bf16.gmra.mxu0 %v102
    %v672 = vpop.f32.mrf.mxu0
    %v673 = vadd.f32 %v624, %v672
    %v674 = vpop.f32.mrf.mxu0
    %v675 = vadd.f32 %v626, %v674
    %676 = vmatmul.bf16.gmra.mxu0 %v104
    %v677 = vpop.f32.mrf.mxu0
    %v678 = vadd.f32 %v629, %v677
    %v679 = vpop.f32.mrf.mxu0
    %v680 = vadd.f32 %v631, %v679
    %681 = vmatmul.bf16.gmra.mxu0 %v106
    %v682 = vpop.f32.mrf.mxu0
    %v683 = vadd.f32 %v634, %v682
    %v684 = vpop.f32.mrf.mxu0
    %v685 = vadd.f32 %v636, %v684
    %686 = vdwg.mxu0
    %687 = vmatpush.bf16.msra.mxu0 %v393
    %688 = vmatpush.bf16.msra.mxu0 %v389
    %689 = vmatpush.bf16.msra.mxu0 %v385
    %690 = vmatpush.bf16.msra.mxu0 %v381
    %691 = vmatpush.bf16.msra.mxu0 %v377
    %692 = vmatpush.bf16.msra.mxu0 %v373
    %693 = vmatpush.bf16.msra.mxu0 %v369
    %694 = vmatpush.bf16.msra.mxu0 %v365
    %695 = vmatmul.bf16.gmra.mxu0 %v91
    %v696 = vpop.f32.mrf.mxu0
    %v697 = vadd.f32 0.0, %v696
    %v698 = vpop.f32.mrf.mxu0
    %v699 = vadd.f32 0.0, %v698
    %700 = vmatmul.bf16.gmra.mxu0 %v93
    %v701 = vpop.f32.mrf.mxu0
    %v702 = vadd.f32 0.0, %v701
    %v703 = vpop.f32.mrf.mxu0
    %v704 = vadd.f32 0.0, %v703
    %705 = vmatmul.bf16.gmra.mxu0 %v95
    %v706 = vpop.f32.mrf.mxu0
    %v707 = vadd.f32 0.0, %v706
    %v708 = vpop.f32.mrf.mxu0
    %v709 = vadd.f32 0.0, %v708
    %710 = vmatmul.bf16.gmra.mxu0 %v97
    %v711 = vpop.f32.mrf.mxu0
    %v712 = vadd.f32 0.0, %v711
    %v713 = vpop.f32.mrf.mxu0
    %v714 = vadd.f32 0.0, %v713
    %715 = vmatmul.bf16.gmra.mxu0 %v99
    %v716 = vpop.f32.mrf.mxu0
    %v717 = vadd.f32 0.0, %v716
    %v718 = vpop.f32.mrf.mxu0
    %v719 = vadd.f32 0.0, %v718
    %720 = vmatmul.bf16.gmra.mxu0 %v101
    %v721 = vpop.f32.mrf.mxu0
    %v722 = vadd.f32 0.0, %v721
    %v723 = vpop.f32.mrf.mxu0
    %v724 = vadd.f32 0.0, %v723
    %725 = vmatmul.bf16.gmra.mxu0 %v103
    %v726 = vpop.f32.mrf.mxu0
    %v727 = vadd.f32 0.0, %v726
    %v728 = vpop.f32.mrf.mxu0
    %v729 = vadd.f32 0.0, %v728
    %730 = vmatmul.bf16.gmra.mxu0 %v105
    %v731 = vpop.f32.mrf.mxu0
    %v732 = vadd.f32 0.0, %v731
    %v733 = vpop.f32.mrf.mxu0
    %v734 = vadd.f32 0.0, %v733
    %735 = vdwg.mxu0
    %736 = vmatpush.bf16.msra.mxu0 %v425
    %737 = vmatpush.bf16.msra.mxu0 %v421
    %738 = vmatpush.bf16.msra.mxu0 %v417
    %739 = vmatpush.bf16.msra.mxu0 %v413
    %740 = vmatpush.bf16.msra.mxu0 %v409
    %741 = vmatpush.bf16.msra.mxu0 %v405
    %742 = vmatpush.bf16.msra.mxu0 %v401
    %743 = vmatpush.bf16.msra.mxu0 %v397
    %744 = vmatmul.bf16.gmra.mxu0 %v92
    %v745 = vpop.f32.mrf.mxu0
    %v746 = vadd.f32 %v697, %v745
    %v747 = vpop.f32.mrf.mxu0
    %v748 = vadd.f32 %v699, %v747
    %749 = vmatmul.bf16.gmra.mxu0 %v94
    %v750 = vpop.f32.mrf.mxu0
    %v751 = vadd.f32 %v702, %v750
    %v752 = vpop.f32.mrf.mxu0
    %v753 = vadd.f32 %v704, %v752
    %754 = vmatmul.bf16.gmra.mxu0 %v96
    %v755 = vpop.f32.mrf.mxu0
    %v756 = vadd.f32 %v707, %v755
    %v757 = vpop.f32.mrf.mxu0
    %v758 = vadd.f32 %v709, %v757
    %759 = vmatmul.bf16.gmra.mxu0 %v98
    %v760 = vpop.f32.mrf.mxu0
    %v761 = vadd.f32 %v712, %v760
    %v762 = vpop.f32.mrf.mxu0
    %v763 = vadd.f32 %v714, %v762
    %764 = vmatmul.bf16.gmra.mxu0 %v100
    %v765 = vpop.f32.mrf.mxu0
    %v766 = vadd.f32 %v717, %v765
    %v767 = vpop.f32.mrf.mxu0
    %v768 = vadd.f32 %v719, %v767
    %769 = vmatmul.bf16.gmra.mxu0 %v102
    %v770 = vpop.f32.mrf.mxu0
    %v771 = vadd.f32 %v722, %v770
    %v772 = vpop.f32.mrf.mxu0
    %v773 = vadd.f32 %v724, %v772
    %774 = vmatmul.bf16.gmra.mxu0 %v104
    %v775 = vpop.f32.mrf.mxu0
    %v776 = vadd.f32 %v727, %v775
    %v777 = vpop.f32.mrf.mxu0
    %v778 = vadd.f32 %v729, %v777
    %779 = vmatmul.bf16.gmra.mxu0 %v106
    %v780 = vpop.f32.mrf.mxu0
    %v781 = vadd.f32 %v732, %v780
    %v782 = vpop.f32.mrf.mxu0
    %v783 = vadd.f32 %v734, %v782
    %784 = vdwg.mxu0
    %785 = vmatpush.bf16.msra.mxu0 %v394
    %786 = vmatpush.bf16.msra.mxu0 %v390
    %787 = vmatpush.bf16.msra.mxu0 %v386
    %788 = vmatpush.bf16.msra.mxu0 %v382
    %789 = vmatpush.bf16.msra.mxu0 %v378
    %790 = vmatpush.bf16.msra.mxu0 %v374
    %791 = vmatpush.bf16.msra.mxu0 %v370
    %792 = vmatpush.bf16.msra.mxu0 %v366
    %793 = vmatmul.bf16.gmra.mxu0 %v91
    %v794 = vpop.f32.mrf.mxu0
    %v795 = vadd.f32 0.0, %v794
    %v796 = vpop.f32.mrf.mxu0
    %v797 = vadd.f32 0.0, %v796
    %798 = vmatmul.bf16.gmra.mxu0 %v93
    %v799 = vpop.f32.mrf.mxu0
    %v800 = vadd.f32 0.0, %v799
    %v801 = vpop.f32.mrf.mxu0
    %v802 = vadd.f32 0.0, %v801
    %803 = vmatmul.bf16.gmra.mxu0 %v95
    %v804 = vpop.f32.mrf.mxu0
    %v805 = vadd.f32 0.0, %v804
    %v806 = vpop.f32.mrf.mxu0
    %v807 = vadd.f32 0.0, %v806
    %808 = vmatmul.bf16.gmra.mxu0 %v97
    %v809 = vpop.f32.mrf.mxu0
    %v810 = vadd.f32 0.0, %v809
    %v811 = vpop.f32.mrf.mxu0
    %v812 = vadd.f32 0.0, %v811
    %813 = vmatmul.bf16.gmra.mxu0 %v99
    %v814 = vpop.f32.mrf.mxu0
    %v815 = vadd.f32 0.0, %v814
    %v816 = vpop.f32.mrf.mxu0
    %v817 = vadd.f32 0.0, %v816
    %818 = vmatmul.bf16.gmra.mxu0 %v101
    %v819 = vpop.f32.mrf.mxu0
    %v820 = vadd.f32 0.0, %v819
    %v821 = vpop.f32.mrf.mxu0
    %v822 = vadd.f32 0.0, %v821
    %823 = vmatmul.bf16.gmra.mxu0 %v103
    %v824 = vpop.f32.mrf.mxu0
    %v825 = vadd.f32 0.0, %v824
    %v826 = vpop.f32.mrf.mxu0
    %v827 = vadd.f32 0.0, %v826
    %828 = vmatmul.bf16.gmra.mxu0 %v105
    %v829 = vpop.f32.mrf.mxu0
    %v830 = vadd.f32 0.0, %v829
    %v831 = vpop.f32.mrf.mxu0
    %v832 = vadd.f32 0.0, %v831
    %833 = vdwg.mxu0
    %834 = vmatpush.bf16.msra.mxu0 %v426
    %835 = vmatpush.bf16.msra.mxu0 %v422
    %836 = vmatpush.bf16.msra.mxu0 %v418
    %837 = vmatpush.bf16.msra.mxu0 %v414
    %838 = vmatpush.bf16.msra.mxu0 %v410
    %839 = vmatpush.bf16.msra.mxu0 %v406
    %840 = vmatpush.bf16.msra.mxu0 %v402
    %841 = vmatpush.bf16.msra.mxu0 %v398
    %842 = vmatmul.bf16.gmra.mxu0 %v92
    %v843 = vpop.f32.mrf.mxu0
    %v844 = vadd.f32 %v795, %v843
    %v845 = vpop.f32.mrf.mxu0
    %v846 = vadd.f32 %v797, %v845
    %847 = vmatmul.bf16.gmra.mxu0 %v94
    %v848 = vpop.f32.mrf.mxu0
    %v849 = vadd.f32 %v800, %v848
    %v850 = vpop.f32.mrf.mxu0
    %v851 = vadd.f32 %v802, %v850
    %852 = vmatmul.bf16.gmra.mxu0 %v96
    %v853 = vpop.f32.mrf.mxu0
    %v854 = vadd.f32 %v805, %v853
    %v855 = vpop.f32.mrf.mxu0
    %v856 = vadd.f32 %v807, %v855
    %857 = vmatmul.bf16.gmra.mxu0 %v98
    %v858 = vpop.f32.mrf.mxu0
    %v859 = vadd.f32 %v810, %v858
    %v860 = vpop.f32.mrf.mxu0
    %v861 = vadd.f32 %v812, %v860
    %862 = vmatmul.bf16.gmra.mxu0 %v100
    %v863 = vpop.f32.mrf.mxu0
    %v864 = vadd.f32 %v815, %v863
    %v865 = vpop.f32.mrf.mxu0
    %v866 = vadd.f32 %v817, %v865
    %867 = vmatmul.bf16.gmra.mxu0 %v102
    %v868 = vpop.f32.mrf.mxu0
    %v869 = vadd.f32 %v820, %v868
    %v870 = vpop.f32.mrf.mxu0
    %v871 = vadd.f32 %v822, %v870
    %872 = vmatmul.bf16.gmra.mxu0 %v104
    %v873 = vpop.f32.mrf.mxu0
    %v874 = vadd.f32 %v825, %v873
    %v875 = vpop.f32.mrf.mxu0
    %v876 = vadd.f32 %v827, %v875
    %877 = vmatmul.bf16.gmra.mxu0 %v106
    %v878 = vpop.f32.mrf.mxu0
    %v879 = vadd.f32 %v830, %v878
    %v880 = vpop.f32.mrf.mxu0
    %v881 = vadd.f32 %v832, %v880
    %882 = vdwg.mxu0
    %v883 = vmul.f32 %v550, %v550
    %v884 = vmul.f32 %v648, %v648
    %v885 = vmul.f32 %v552, %v552
    %v886 = vmul.f32 %v650, %v650
    %v887 = vmul.f32 %v555, %v555
    %v888 = vmul.f32 %v653, %v653
    %v889 = vmul.f32 %v557, %v557
    %v890 = vmul.f32 %v655, %v655
    %v891 = vmul.f32 %v560, %v560
    %v892 = vmul.f32 %v658, %v658
    %v893 = vmul.f32 %v562, %v562
    %v894 = vmul.f32 %v660, %v660
    %v895 = vmul.f32 %v565, %v565
    %v896 = vmul.f32 %v663, %v663
    %v897 = vmul.f32 %v567, %v567
    %v898 = vmul.f32 %v665, %v665
    %v899 = vmul.f32 %v570, %v570
    %v900 = vmul.f32 %v668, %v668
    %v901 = vmul.f32 %v572, %v572
    %v902 = vmul.f32 %v670, %v670
    %v903 = vmul.f32 %v575, %v575
    %v904 = vmul.f32 %v673, %v673
    %v905 = vmul.f32 %v577, %v577
    %v906 = vmul.f32 %v675, %v675
    %v907 = vmul.f32 %v580, %v580
    %v908 = vmul.f32 %v678, %v678
    %v909 = vmul.f32 %v582, %v582
    %v910 = vmul.f32 %v680, %v680
    %v911 = vmul.f32 %v585, %v585
    %v912 = vmul.f32 %v683, %v683
    %v913 = vmul.f32 %v587, %v587
    %v914 = vmul.f32 %v685, %v685
    %v915 = vmul.f32 %v746, %v746
    %v916 = vmul.f32 %v844, %v844
    %v917 = vmul.f32 %v748, %v748
    %v918 = vmul.f32 %v846, %v846
    %v919 = vmul.f32 %v751, %v751
    %v920 = vmul.f32 %v849, %v849
    %v921 = vmul.f32 %v753, %v753
    %v922 = vmul.f32 %v851, %v851
    %v923 = vmul.f32 %v756, %v756
    %v924 = vmul.f32 %v854, %v854
    %v925 = vmul.f32 %v758, %v758
    %v926 = vmul.f32 %v856, %v856
    %v927 = vmul.f32 %v761, %v761
    %v928 = vmul.f32 %v859, %v859
    %v929 = vmul.f32 %v763, %v763
    %v930 = vmul.f32 %v861, %v861
    %v931 = vmul.f32 %v766, %v766
    %v932 = vmul.f32 %v864, %v864
    %v933 = vmul.f32 %v768, %v768
    %v934 = vmul.f32 %v866, %v866
    %v935 = vmul.f32 %v771, %v771
    %v936 = vmul.f32 %v869, %v869
    %v937 = vmul.f32 %v773, %v773
    %v938 = vmul.f32 %v871, %v871
    %v939 = vmul.f32 %v776, %v776
    %v940 = vmul.f32 %v874, %v874
    %v941 = vmul.f32 %v778, %v778
    %v942 = vmul.f32 %v876, %v876
    %v943 = vmul.f32 %v781, %v781
    %v944 = vmul.f32 %v879, %v879
    %v945 = vmul.f32 %v783, %v783
    %v946 = vmul.f32 %v881, %v881
    %v947 = vadd.f32 %v883, %v915
    %v948 = vadd.f32 %v884, %v916
    %v949 = vadd.f32 %v885, %v917
    %v950 = vadd.f32 %v886, %v918
    %v951 = vadd.f32 %v887, %v919
    %v952 = vadd.f32 %v888, %v920
    %v953 = vadd.f32 %v889, %v921
    %v954 = vadd.f32 %v890, %v922
    %v955 = vadd.f32 %v891, %v923
    %v956 = vadd.f32 %v892, %v924
    %v957 = vadd.f32 %v893, %v925
    %v958 = vadd.f32 %v894, %v926
    %v959 = vadd.f32 %v895, %v927
    %v960 = vadd.f32 %v896, %v928
    %v961 = vadd.f32 %v897, %v929
    %v962 = vadd.f32 %v898, %v930
    %v963 = vadd.f32 %v899, %v931
    %v964 = vadd.f32 %v900, %v932
    %v965 = vadd.f32 %v901, %v933
    %v966 = vadd.f32 %v902, %v934
    %v967 = vadd.f32 %v903, %v935
    %v968 = vadd.f32 %v904, %v936
    %v969 = vadd.f32 %v905, %v937
    %v970 = vadd.f32 %v906, %v938
    %v971 = vadd.f32 %v907, %v939
    %v972 = vadd.f32 %v908, %v940
    %v973 = vadd.f32 %v909, %v941
    %v974 = vadd.f32 %v910, %v942
    %v975 = vadd.f32 %v911, %v943
    %v976 = vadd.f32 %v912, %v944
    %v977 = vadd.f32 %v913, %v945
    %v978 = vadd.f32 %v914, %v946
    %v979 = vrsqrt.pop %v947
    %v980 = vmul.f32 %v979, %v947
    %v981 = vmul.f32 %v980, %v979
    %v982 = vmul.f32 0.5, %v981
    %v983 = vsub.f32 1.5, %v982
    %v984 = vmul.f32 %v979, %v983
    %v985 = vmul.f32 %v947, %v984
    %vm986 = vcmp.eq.f32.partialorder %v947, inf
    %v987 = vsel %vm986, %v947, %v985
    %vm988 = vcmp.eq.f32.partialorder %v947, 0.0
    %v989 = vand.u32 %v947, 2147483648
    %v990 = vsel %vm988, %v989, %v987
    %v991 = vrsqrt.pop %v948
    %v992 = vmul.f32 %v991, %v948
    %v993 = vmul.f32 %v992, %v991
    %v994 = vmul.f32 0.5, %v993
    %v995 = vsub.f32 1.5, %v994
    %v996 = vmul.f32 %v991, %v995
    %v997 = vmul.f32 %v948, %v996
    %vm998 = vcmp.eq.f32.partialorder %v948, inf
    %v999 = vsel %vm998, %v948, %v997
    %vm1000 = vcmp.eq.f32.partialorder %v948, 0.0
    %v1001 = vand.u32 %v948, 2147483648
    %v1002 = vsel %vm1000, %v1001, %v999
    %v1003 = vrsqrt.pop %v949
    %v1004 = vmul.f32 %v1003, %v949
    %v1005 = vmul.f32 %v1004, %v1003
    %v1006 = vmul.f32 0.5, %v1005
    %v1007 = vsub.f32 1.5, %v1006
    %v1008 = vmul.f32 %v1003, %v1007
    %v1009 = vmul.f32 %v949, %v1008
    %vm1010 = vcmp.eq.f32.partialorder %v949, inf
    %v1011 = vsel %vm1010, %v949, %v1009
    %vm1012 = vcmp.eq.f32.partialorder %v949, 0.0
    %v1013 = vand.u32 %v949, 2147483648
    %v1014 = vsel %vm1012, %v1013, %v1011
    %v1015 = vrsqrt.pop %v950
    %v1016 = vmul.f32 %v1015, %v950
    %v1017 = vmul.f32 %v1016, %v1015
    %v1018 = vmul.f32 0.5, %v1017
    %v1019 = vsub.f32 1.5, %v1018
    %v1020 = vmul.f32 %v1015, %v1019
    %v1021 = vmul.f32 %v950, %v1020
    %vm1022 = vcmp.eq.f32.partialorder %v950, inf
    %v1023 = vsel %vm1022, %v950, %v1021
    %vm1024 = vcmp.eq.f32.partialorder %v950, 0.0
    %v1025 = vand.u32 %v950, 2147483648
    %v1026 = vsel %vm1024, %v1025, %v1023
    %v1027 = vrsqrt.pop %v951
    %v1028 = vmul.f32 %v1027, %v951
    %v1029 = vmul.f32 %v1028, %v1027
    %v1030 = vmul.f32 0.5, %v1029
    %v1031 = vsub.f32 1.5, %v1030
    %v1032 = vmul.f32 %v1027, %v1031
    %v1033 = vmul.f32 %v951, %v1032
    %vm1034 = vcmp.eq.f32.partialorder %v951, inf
    %v1035 = vsel %vm1034, %v951, %v1033
    %vm1036 = vcmp.eq.f32.partialorder %v951, 0.0
    %v1037 = vand.u32 %v951, 2147483648
    %v1038 = vsel %vm1036, %v1037, %v1035
    %v1039 = vrsqrt.pop %v952
    %v1040 = vmul.f32 %v1039, %v952
    %v1041 = vmul.f32 %v1040, %v1039
    %v1042 = vmul.f32 0.5, %v1041
    %v1043 = vsub.f32 1.5, %v1042
    %v1044 = vmul.f32 %v1039, %v1043
    %v1045 = vmul.f32 %v952, %v1044
    %vm1046 = vcmp.eq.f32.partialorder %v952, inf
    %v1047 = vsel %vm1046, %v952, %v1045
    %vm1048 = vcmp.eq.f32.partialorder %v952, 0.0
    %v1049 = vand.u32 %v952, 2147483648
    %v1050 = vsel %vm1048, %v1049, %v1047
    %v1051 = vrsqrt.pop %v953
    %v1052 = vmul.f32 %v1051, %v953
    %v1053 = vmul.f32 %v1052, %v1051
    %v1054 = vmul.f32 0.5, %v1053
    %v1055 = vsub.f32 1.5, %v1054
    %v1056 = vmul.f32 %v1051, %v1055
    %v1057 = vmul.f32 %v953, %v1056
    %vm1058 = vcmp.eq.f32.partialorder %v953, inf
    %v1059 = vsel %vm1058, %v953, %v1057
    %vm1060 = vcmp.eq.f32.partialorder %v953, 0.0
    %v1061 = vand.u32 %v953, 2147483648
    %v1062 = vsel %vm1060, %v1061, %v1059
    %v1063 = vrsqrt.pop %v954
    %v1064 = vmul.f32 %v1063, %v954
    %v1065 = vmul.f32 %v1064, %v1063
    %v1066 = vmul.f32 0.5, %v1065
    %v1067 = vsub.f32 1.5, %v1066
    %v1068 = vmul.f32 %v1063, %v1067
    %v1069 = vmul.f32 %v954, %v1068
    %vm1070 = vcmp.eq.f32.partialorder %v954, inf
    %v1071 = vsel %vm1070, %v954, %v1069
    %vm1072 = vcmp.eq.f32.partialorder %v954, 0.0
    %v1073 = vand.u32 %v954, 2147483648
    %v1074 = vsel %vm1072, %v1073, %v1071
    %v1075 = vrsqrt.pop %v955
    %v1076 = vmul.f32 %v1075, %v955
    %v1077 = vmul.f32 %v1076, %v1075
    %v1078 = vmul.f32 0.5, %v1077
    %v1079 = vsub.f32 1.5, %v1078
    %v1080 = vmul.f32 %v1075, %v1079
    %v1081 = vmul.f32 %v955, %v1080
    %vm1082 = vcmp.eq.f32.partialorder %v955, inf
    %v1083 = vsel %vm1082, %v955, %v1081
    %vm1084 = vcmp.eq.f32.partialorder %v955, 0.0
    %v1085 = vand.u32 %v955, 2147483648
    %v1086 = vsel %vm1084, %v1085, %v1083
    %v1087 = vrsqrt.pop %v956
    %v1088 = vmul.f32 %v1087, %v956
    %v1089 = vmul.f32 %v1088, %v1087
    %v1090 = vmul.f32 0.5, %v1089
    %v1091 = vsub.f32 1.5, %v1090
    %v1092 = vmul.f32 %v1087, %v1091
    %v1093 = vmul.f32 %v956, %v1092
    %vm1094 = vcmp.eq.f32.partialorder %v956, inf
    %v1095 = vsel %vm1094, %v956, %v1093
    %vm1096 = vcmp.eq.f32.partialorder %v956, 0.0
    %v1097 = vand.u32 %v956, 2147483648
    %v1098 = vsel %vm1096, %v1097, %v1095
    %v1099 = vrsqrt.pop %v957
    %v1100 = vmul.f32 %v1099, %v957
    %v1101 = vmul.f32 %v1100, %v1099
    %v1102 = vmul.f32 0.5, %v1101
    %v1103 = vsub.f32 1.5, %v1102
    %v1104 = vmul.f32 %v1099, %v1103
    %v1105 = vmul.f32 %v957, %v1104
    %vm1106 = vcmp.eq.f32.partialorder %v957, inf
    %v1107 = vsel %vm1106, %v957, %v1105
    %vm1108 = vcmp.eq.f32.partialorder %v957, 0.0
    %v1109 = vand.u32 %v957, 2147483648
    %v1110 = vsel %vm1108, %v1109, %v1107
    %v1111 = vrsqrt.pop %v958
    %v1112 = vmul.f32 %v1111, %v958
    %v1113 = vmul.f32 %v1112, %v1111
    %v1114 = vmul.f32 0.5, %v1113
    %v1115 = vsub.f32 1.5, %v1114
    %v1116 = vmul.f32 %v1111, %v1115
    %v1117 = vmul.f32 %v958, %v1116
    %vm1118 = vcmp.eq.f32.partialorder %v958, inf
    %v1119 = vsel %vm1118, %v958, %v1117
    %vm1120 = vcmp.eq.f32.partialorder %v958, 0.0
    %v1121 = vand.u32 %v958, 2147483648
    %v1122 = vsel %vm1120, %v1121, %v1119
    %v1123 = vrsqrt.pop %v959
    %v1124 = vmul.f32 %v1123, %v959
    %v1125 = vmul.f32 %v1124, %v1123
    %v1126 = vmul.f32 0.5, %v1125
    %v1127 = vsub.f32 1.5, %v1126
    %v1128 = vmul.f32 %v1123, %v1127
    %v1129 = vmul.f32 %v959, %v1128
    %vm1130 = vcmp.eq.f32.partialorder %v959, inf
    %v1131 = vsel %vm1130, %v959, %v1129
    %vm1132 = vcmp.eq.f32.partialorder %v959, 0.0
    %v1133 = vand.u32 %v959, 2147483648
    %v1134 = vsel %vm1132, %v1133, %v1131
    %v1135 = vrsqrt.pop %v960
    %v1136 = vmul.f32 %v1135, %v960
    %v1137 = vmul.f32 %v1136, %v1135
    %v1138 = vmul.f32 0.5, %v1137
    %v1139 = vsub.f32 1.5, %v1138
    %v1140 = vmul.f32 %v1135, %v1139
    %v1141 = vmul.f32 %v960, %v1140
    %vm1142 = vcmp.eq.f32.partialorder %v960, inf
    %v1143 = vsel %vm1142, %v960, %v1141
    %vm1144 = vcmp.eq.f32.partialorder %v960, 0.0
    %v1145 = vand.u32 %v960, 2147483648
    %v1146 = vsel %vm1144, %v1145, %v1143
    %v1147 = vrsqrt.pop %v961
    %v1148 = vmul.f32 %v1147, %v961
    %v1149 = vmul.f32 %v1148, %v1147
    %v1150 = vmul.f32 0.5, %v1149
    %v1151 = vsub.f32 1.5, %v1150
    %v1152 = vmul.f32 %v1147, %v1151
    %v1153 = vmul.f32 %v961, %v1152
    %vm1154 = vcmp.eq.f32.partialorder %v961, inf
    %v1155 = vsel %vm1154, %v961, %v1153
    %vm1156 = vcmp.eq.f32.partialorder %v961, 0.0
    %v1157 = vand.u32 %v961, 2147483648
    %v1158 = vsel %vm1156, %v1157, %v1155
    %v1159 = vrsqrt.pop %v962
    %v1160 = vmul.f32 %v1159, %v962
    %v1161 = vmul.f32 %v1160, %v1159
    %v1162 = vmul.f32 0.5, %v1161
    %v1163 = vsub.f32 1.5, %v1162
    %v1164 = vmul.f32 %v1159, %v1163
    %v1165 = vmul.f32 %v962, %v1164
    %vm1166 = vcmp.eq.f32.partialorder %v962, inf
    %v1167 = vsel %vm1166, %v962, %v1165
    %vm1168 = vcmp.eq.f32.partialorder %v962, 0.0
    %v1169 = vand.u32 %v962, 2147483648
    %v1170 = vsel %vm1168, %v1169, %v1167
    %v1171 = vrsqrt.pop %v963
    %v1172 = vmul.f32 %v1171, %v963
    %v1173 = vmul.f32 %v1172, %v1171
    %v1174 = vmul.f32 0.5, %v1173
    %v1175 = vsub.f32 1.5, %v1174
    %v1176 = vmul.f32 %v1171, %v1175
    %v1177 = vmul.f32 %v963, %v1176
    %vm1178 = vcmp.eq.f32.partialorder %v963, inf
    %v1179 = vsel %vm1178, %v963, %v1177
    %vm1180 = vcmp.eq.f32.partialorder %v963, 0.0
    %v1181 = vand.u32 %v963, 2147483648
    %v1182 = vsel %vm1180, %v1181, %v1179
    %v1183 = vrsqrt.pop %v964
    %v1184 = vmul.f32 %v1183, %v964
    %v1185 = vmul.f32 %v1184, %v1183
    %v1186 = vmul.f32 0.5, %v1185
    %v1187 = vsub.f32 1.5, %v1186
    %v1188 = vmul.f32 %v1183, %v1187
    %v1189 = vmul.f32 %v964, %v1188
    %vm1190 = vcmp.eq.f32.partialorder %v964, inf
    %v1191 = vsel %vm1190, %v964, %v1189
    %vm1192 = vcmp.eq.f32.partialorder %v964, 0.0
    %v1193 = vand.u32 %v964, 2147483648
    %v1194 = vsel %vm1192, %v1193, %v1191
    %v1195 = vrsqrt.pop %v965
    %v1196 = vmul.f32 %v1195, %v965
    %v1197 = vmul.f32 %v1196, %v1195
    %v1198 = vmul.f32 0.5, %v1197
    %v1199 = vsub.f32 1.5, %v1198
    %v1200 = vmul.f32 %v1195, %v1199
    %v1201 = vmul.f32 %v965, %v1200
    %vm1202 = vcmp.eq.f32.partialorder %v965, inf
    %v1203 = vsel %vm1202, %v965, %v1201
    %vm1204 = vcmp.eq.f32.partialorder %v965, 0.0
    %v1205 = vand.u32 %v965, 2147483648
    %v1206 = vsel %vm1204, %v1205, %v1203
    %v1207 = vrsqrt.pop %v966
    %v1208 = vmul.f32 %v1207, %v966
    %v1209 = vmul.f32 %v1208, %v1207
    %v1210 = vmul.f32 0.5, %v1209
    %v1211 = vsub.f32 1.5, %v1210
    %v1212 = vmul.f32 %v1207, %v1211
    %v1213 = vmul.f32 %v966, %v1212
    %vm1214 = vcmp.eq.f32.partialorder %v966, inf
    %v1215 = vsel %vm1214, %v966, %v1213
    %vm1216 = vcmp.eq.f32.partialorder %v966, 0.0
    %v1217 = vand.u32 %v966, 2147483648
    %v1218 = vsel %vm1216, %v1217, %v1215
    %v1219 = vrsqrt.pop %v967
    %v1220 = vmul.f32 %v1219, %v967
    %v1221 = vmul.f32 %v1220, %v1219
    %v1222 = vmul.f32 0.5, %v1221
    %v1223 = vsub.f32 1.5, %v1222
    %v1224 = vmul.f32 %v1219, %v1223
    %v1225 = vmul.f32 %v967, %v1224
    %vm1226 = vcmp.eq.f32.partialorder %v967, inf
    %v1227 = vsel %vm1226, %v967, %v1225
    %vm1228 = vcmp.eq.f32.partialorder %v967, 0.0
    %v1229 = vand.u32 %v967, 2147483648
    %v1230 = vsel %vm1228, %v1229, %v1227
    %v1231 = vrsqrt.pop %v968
    %v1232 = vmul.f32 %v1231, %v968
    %v1233 = vmul.f32 %v1232, %v1231
    %v1234 = vmul.f32 0.5, %v1233
    %v1235 = vsub.f32 1.5, %v1234
    %v1236 = vmul.f32 %v1231, %v1235
    %v1237 = vmul.f32 %v968, %v1236
    %vm1238 = vcmp.eq.f32.partialorder %v968, inf
    %v1239 = vsel %vm1238, %v968, %v1237
    %vm1240 = vcmp.eq.f32.partialorder %v968, 0.0
    %v1241 = vand.u32 %v968, 2147483648
    %v1242 = vsel %vm1240, %v1241, %v1239
    %v1243 = vrsqrt.pop %v969
    %v1244 = vmul.f32 %v1243, %v969
    %v1245 = vmul.f32 %v1244, %v1243
    %v1246 = vmul.f32 0.5, %v1245
    %v1247 = vsub.f32 1.5, %v1246
    %v1248 = vmul.f32 %v1243, %v1247
    %v1249 = vmul.f32 %v969, %v1248
    %vm1250 = vcmp.eq.f32.partialorder %v969, inf
    %v1251 = vsel %vm1250, %v969, %v1249
    %vm1252 = vcmp.eq.f32.partialorder %v969, 0.0
    %v1253 = vand.u32 %v969, 2147483648
    %v1254 = vsel %vm1252, %v1253, %v1251
    %v1255 = vrsqrt.pop %v970
    %v1256 = vmul.f32 %v1255, %v970
    %v1257 = vmul.f32 %v1256, %v1255
    %v1258 = vmul.f32 0.5, %v1257
    %v1259 = vsub.f32 1.5, %v1258
    %v1260 = vmul.f32 %v1255, %v1259
    %v1261 = vmul.f32 %v970, %v1260
    %vm1262 = vcmp.eq.f32.partialorder %v970, inf
    %v1263 = vsel %vm1262, %v970, %v1261
    %vm1264 = vcmp.eq.f32.partialorder %v970, 0.0
    %v1265 = vand.u32 %v970, 2147483648
    %v1266 = vsel %vm1264, %v1265, %v1263
    %v1267 = vrsqrt.pop %v971
    %v1268 = vmul.f32 %v1267, %v971
    %v1269 = vmul.f32 %v1268, %v1267
    %v1270 = vmul.f32 0.5, %v1269
    %v1271 = vsub.f32 1.5, %v1270
    %v1272 = vmul.f32 %v1267, %v1271
    %v1273 = vmul.f32 %v971, %v1272
    %vm1274 = vcmp.eq.f32.partialorder %v971, inf
    %v1275 = vsel %vm1274, %v971, %v1273
    %vm1276 = vcmp.eq.f32.partialorder %v971, 0.0
    %v1277 = vand.u32 %v971, 2147483648
    %v1278 = vsel %vm1276, %v1277, %v1275
    %v1279 = vrsqrt.pop %v972
    %v1280 = vmul.f32 %v1279, %v972
    %v1281 = vmul.f32 %v1280, %v1279
    %v1282 = vmul.f32 0.5, %v1281
    %v1283 = vsub.f32 1.5, %v1282
    %v1284 = vmul.f32 %v1279, %v1283
    %v1285 = vmul.f32 %v972, %v1284
    %vm1286 = vcmp.eq.f32.partialorder %v972, inf
    %v1287 = vsel %vm1286, %v972, %v1285
    %vm1288 = vcmp.eq.f32.partialorder %v972, 0.0
    %v1289 = vand.u32 %v972, 2147483648
    %v1290 = vsel %vm1288, %v1289, %v1287
    %v1291 = vrsqrt.pop %v973
    %v1292 = vmul.f32 %v1291, %v973
    %v1293 = vmul.f32 %v1292, %v1291
    %v1294 = vmul.f32 0.5, %v1293
    %v1295 = vsub.f32 1.5, %v1294
    %v1296 = vmul.f32 %v1291, %v1295
    %v1297 = vmul.f32 %v973, %v1296
    %vm1298 = vcmp.eq.f32.partialorder %v973, inf
    %v1299 = vsel %vm1298, %v973, %v1297
    %vm1300 = vcmp.eq.f32.partialorder %v973, 0.0
    %v1301 = vand.u32 %v973, 2147483648
    %v1302 = vsel %vm1300, %v1301, %v1299
    %v1303 = vrsqrt.pop %v974
    %v1304 = vmul.f32 %v1303, %v974
    %v1305 = vmul.f32 %v1304, %v1303
    %v1306 = vmul.f32 0.5, %v1305
    %v1307 = vsub.f32 1.5, %v1306
    %v1308 = vmul.f32 %v1303, %v1307
    %v1309 = vmul.f32 %v974, %v1308
    %vm1310 = vcmp.eq.f32.partialorder %v974, inf
    %v1311 = vsel %vm1310, %v974, %v1309
    %vm1312 = vcmp.eq.f32.partialorder %v974, 0.0
    %v1313 = vand.u32 %v974, 2147483648
    %v1314 = vsel %vm1312, %v1313, %v1311
    %v1315 = vrsqrt.pop %v975
    %v1316 = vmul.f32 %v1315, %v975
    %v1317 = vmul.f32 %v1316, %v1315
    %v1318 = vmul.f32 0.5, %v1317
    %v1319 = vsub.f32 1.5, %v1318
    %v1320 = vmul.f32 %v1315, %v1319
    %v1321 = vmul.f32 %v975, %v1320
    %vm1322 = vcmp.eq.f32.partialorder %v975, inf
    %v1323 = vsel %vm1322, %v975, %v1321
    %vm1324 = vcmp.eq.f32.partialorder %v975, 0.0
    %v1325 = vand.u32 %v975, 2147483648
    %v1326 = vsel %vm1324, %v1325, %v1323
    %v1327 = vrsqrt.pop %v976
    %v1328 = vmul.f32 %v1327, %v976
    %v1329 = vmul.f32 %v1328, %v1327
    %v1330 = vmul.f32 0.5, %v1329
    %v1331 = vsub.f32 1.5, %v1330
    %v1332 = vmul.f32 %v1327, %v1331
    %v1333 = vmul.f32 %v976, %v1332
    %vm1334 = vcmp.eq.f32.partialorder %v976, inf
    %v1335 = vsel %vm1334, %v976, %v1333
    %vm1336 = vcmp.eq.f32.partialorder %v976, 0.0
    %v1337 = vand.u32 %v976, 2147483648
    %v1338 = vsel %vm1336, %v1337, %v1335
    %v1339 = vrsqrt.pop %v977
    %v1340 = vmul.f32 %v1339, %v977
    %v1341 = vmul.f32 %v1340, %v1339
    %v1342 = vmul.f32 0.5, %v1341
    %v1343 = vsub.f32 1.5, %v1342
    %v1344 = vmul.f32 %v1339, %v1343
    %v1345 = vmul.f32 %v977, %v1344
    %vm1346 = vcmp.eq.f32.partialorder %v977, inf
    %v1347 = vsel %vm1346, %v977, %v1345
    %vm1348 = vcmp.eq.f32.partialorder %v977, 0.0
    %v1349 = vand.u32 %v977, 2147483648
    %v1350 = vsel %vm1348, %v1349, %v1347
    %v1351 = vrsqrt.pop %v978
    %v1352 = vmul.f32 %v1351, %v978
    %v1353 = vmul.f32 %v1352, %v1351
    %v1354 = vmul.f32 0.5, %v1353
    %v1355 = vsub.f32 1.5, %v1354
    %v1356 = vmul.f32 %v1351, %v1355
    %v1357 = vmul.f32 %v978, %v1356
    %vm1358 = vcmp.eq.f32.partialorder %v978, inf
    %v1359 = vsel %vm1358, %v978, %v1357
    %vm1360 = vcmp.eq.f32.partialorder %v978, 0.0
    %v1361 = vand.u32 %v978, 2147483648
    %v1362 = vsel %vm1360, %v1361, %v1359
    %v1363 = vmax.f32 %v990, %v1002
    %1364 = vmax.xlane.f32.xlu0 %v1363
    %v1365 = vpop.xlane.xlu0 %1364
    %v1366 = vmax.f32 %v1014, %v1026
    %1367 = vmax.xlane.f32.xlu0 %v1366
    %v1368 = vpop.xlane.xlu0 %1367
    %v1369 = vmax.f32 %v1038, %v1050
    %1370 = vmax.xlane.f32.xlu0 %v1369
    %v1371 = vpop.xlane.xlu0 %1370
    %v1372 = vmax.f32 %v1062, %v1074
    %1373 = vmax.xlane.f32.xlu0 %v1372
    %v1374 = vpop.xlane.xlu0 %1373
    %v1375 = vmax.f32 %v1086, %v1098
    %1376 = vmax.xlane.f32.xlu0 %v1375
    %v1377 = vpop.xlane.xlu0 %1376
    %v1378 = vmax.f32 %v1110, %v1122
    %1379 = vmax.xlane.f32.xlu0 %v1378
    %v1380 = vpop.xlane.xlu0 %1379
    %v1381 = vmax.f32 %v1134, %v1146
    %1382 = vmax.xlane.f32.xlu0 %v1381
    %v1383 = vpop.xlane.xlu0 %1382
    %v1384 = vmax.f32 %v1158, %v1170
    %1385 = vmax.xlane.f32.xlu0 %v1384
    %v1386 = vpop.xlane.xlu0 %1385
    %v1387 = vmax.f32 %v1182, %v1194
    %1388 = vmax.xlane.f32.xlu0 %v1387
    %v1389 = vpop.xlane.xlu0 %1388
    %v1390 = vmax.f32 %v1206, %v1218
    %1391 = vmax.xlane.f32.xlu0 %v1390
    %v1392 = vpop.xlane.xlu0 %1391
    %v1393 = vmax.f32 %v1230, %v1242
    %1394 = vmax.xlane.f32.xlu0 %v1393
    %v1395 = vpop.xlane.xlu0 %1394
    %v1396 = vmax.f32 %v1254, %v1266
    %1397 = vmax.xlane.f32.xlu0 %v1396
    %v1398 = vpop.xlane.xlu0 %1397
    %v1399 = vmax.f32 %v1278, %v1290
    %1400 = vmax.xlane.f32.xlu0 %v1399
    %v1401 = vpop.xlane.xlu0 %1400
    %v1402 = vmax.f32 %v1302, %v1314
    %1403 = vmax.xlane.f32.xlu0 %v1402
    %v1404 = vpop.xlane.xlu0 %1403
    %v1405 = vmax.f32 %v1326, %v1338
    %1406 = vmax.xlane.f32.xlu0 %v1405
    %v1407 = vpop.xlane.xlu0 %1406
    %v1408 = vmax.f32 %v1350, %v1362
    %1409 = vmax.xlane.f32.xlu0 %v1408
    %v1410 = vpop.xlane.xlu0 %1409
    %v1411 = vmax.f32 %v1365, %v1377
    %v1412 = vmax.f32 %v1368, %v1380
    %v1413 = vmax.f32 %v1371, %v1383
    %v1414 = vmax.f32 %v1374, %v1386
    %v1415 = vmax.f32 %v1411, %v1389
    %v1416 = vmax.f32 %v1412, %v1392
    %v1417 = vmax.f32 %v1413, %v1395
    %v1418 = vmax.f32 %v1414, %v1398
    %v1419 = vmax.f32 %v1415, %v1401
    %v1420 = vmax.f32 %v1416, %v1404
    %v1421 = vmax.f32 %v1417, %v1407
    %v1422 = vmax.f32 %v1418, %v1410
    %v1423 = vmax.f32 %v1419, %v1420
    %v1424 = vmax.f32 %v1421, %v1422
    %v1425 = vmax.f32 %v1423, %v1424
    %v1426 = vrot.slane %v1425, 4
    %v1427 = vmax.f32 %v1425, %v1426
    %v1428 = vrot.slane %v1427, 2
    %v1429 = vmax.f32 %v1427, %v1428
    %v1430 = vrot.slane %v1429, 1
    %v1431 = vmax.f32 %v1429, %v1430
    %v1432 = vrcp.pop %v1431
    %v1433 = vmul.f32 %v1431, %v1432
    %v1434 = vsub.f32 1.0, %v1433
    %v1435 = vmul.f32 %v1432, %v1434
    %v1436 = vadd.f32 %v1432, %v1435
    %vm1437 = vweird.f32 %v1431
    %vm1438 = vweird.f32 %v1432
    %vm1439 = vmor %vm1437, %vm1438
    %v1440 = vsel %vm1439, %v1432, %v1436
    %v1441 = vand.u32 2147483647, %v1431
    %vm1442 = vcmp.eq.f32.partialorder %v1441, 8.507059e+37
    %v1443 = vand.u32 %v1431, 2147483648
    %v1444 = vor.u32 1.1754944e-38, %v1443
    %v1445 = vsel %vm1442, %v1444, %v1440
    %v1446 = vmul.f32 1.0, %v1445
    %v1447 = vmul.f32 %v990, %v1446
    %v1448 = vmul.f32 %v1002, %v1446
    %v1449 = vmul.f32 %v1014, %v1446
    %v1450 = vmul.f32 %v1026, %v1446
    %v1451 = vmul.f32 %v1038, %v1446
    %v1452 = vmul.f32 %v1050, %v1446
    %v1453 = vmul.f32 %v1062, %v1446
    %v1454 = vmul.f32 %v1074, %v1446
    %v1455 = vmul.f32 %v1086, %v1446
    %v1456 = vmul.f32 %v1098, %v1446
    %v1457 = vmul.f32 %v1110, %v1446
    %v1458 = vmul.f32 %v1122, %v1446
    %v1459 = vmul.f32 %v1134, %v1446
    %v1460 = vmul.f32 %v1146, %v1446
    %v1461 = vmul.f32 %v1158, %v1446
    %v1462 = vmul.f32 %v1170, %v1446
    %v1463 = vmul.f32 %v1182, %v1446
    %v1464 = vmul.f32 %v1194, %v1446
    %v1465 = vmul.f32 %v1206, %v1446
    %v1466 = vmul.f32 %v1218, %v1446
    %v1467 = vmul.f32 %v1230, %v1446
    %v1468 = vmul.f32 %v1242, %v1446
    %v1469 = vmul.f32 %v1254, %v1446
    %v1470 = vmul.f32 %v1266, %v1446
    %v1471 = vmul.f32 %v1278, %v1446
    %v1472 = vmul.f32 %v1290, %v1446
    %v1473 = vmul.f32 %v1302, %v1446
    %v1474 = vmul.f32 %v1314, %v1446
    %v1475 = vmul.f32 %v1326, %v1446
    %v1476 = vmul.f32 %v1338, %v1446
    %v1477 = vmul.f32 %v1350, %v1446
    %v1478 = vmul.f32 %v1362, %v1446
    %v1479 = vlaneseq
    %v1480 = vand.u32 %v1479, 127
    %v1481 = vadd.s32 %v1480, 128
    %s1482 = sld [smem:[#allocation6 + $0x2]]
    %v1483 = vstv %s1482
    %v1484 = vmul.f32 %v1483, %v1447
    %v1485 = vmul.f32 %v1483, %v1448
    %v1486 = vmul.f32 %v1483, %v1449
    %v1487 = vmul.f32 %v1483, %v1450
    %v1488 = vmul.f32 %v1483, %v1451
    %v1489 = vmul.f32 %v1483, %v1452
    %v1490 = vmul.f32 %v1483, %v1453
    %v1491 = vmul.f32 %v1483, %v1454
    %v1492 = vmul.f32 %v1483, %v1455
    %v1493 = vmul.f32 %v1483, %v1456
    %v1494 = vmul.f32 %v1483, %v1457
    %v1495 = vmul.f32 %v1483, %v1458
    %v1496 = vmul.f32 %v1483, %v1459
    %v1497 = vmul.f32 %v1483, %v1460
    %v1498 = vmul.f32 %v1483, %v1461
    %v1499 = vmul.f32 %v1483, %v1462
    %v1500 = vmul.f32 %v1483, %v1463
    %v1501 = vmul.f32 %v1483, %v1464
    %v1502 = vmul.f32 %v1483, %v1465
    %v1503 = vmul.f32 %v1483, %v1466
    %v1504 = vmul.f32 %v1483, %v1467
    %v1505 = vmul.f32 %v1483, %v1468
    %v1506 = vmul.f32 %v1483, %v1469
    %v1507 = vmul.f32 %v1483, %v1470
    %v1508 = vmul.f32 %v1483, %v1471
    %v1509 = vmul.f32 %v1483, %v1472
    %v1510 = vmul.f32 %v1483, %v1473
    %v1511 = vmul.f32 %v1483, %v1474
    %v1512 = vmul.f32 %v1483, %v1475
    %v1513 = vmul.f32 %v1483, %v1476
    %v1514 = vmul.f32 %v1483, %v1477
    %v1515 = vmul.f32 %v1483, %v1478
    %1516 = vrot.lane.b32.xlu0 %v1447, 2
    %v1517 = vpop.permute.xlu0 %1516
    %1518 = vrot.lane.b32.xlu0 %v1449, 2
    %v1519 = vpop.permute.xlu0 %1518
    %1520 = vrot.lane.b32.xlu0 %v1451, 2
    %v1521 = vpop.permute.xlu0 %1520
    %1522 = vrot.lane.b32.xlu0 %v1453, 2
    %v1523 = vpop.permute.xlu0 %1522
    %1524 = vrot.lane.b32.xlu0 %v1455, 2
    %v1525 = vpop.permute.xlu0 %1524
    %1526 = vrot.lane.b32.xlu0 %v1457, 2
    %v1527 = vpop.permute.xlu0 %1526
    %1528 = vrot.lane.b32.xlu0 %v1459, 2
    %v1529 = vpop.permute.xlu0 %1528
    %1530 = vrot.lane.b32.xlu0 %v1461, 2
    %v1531 = vpop.permute.xlu0 %1530
    %1532 = vrot.lane.b32.xlu0 %v1463, 2
    %v1533 = vpop.permute.xlu0 %1532
    %1534 = vrot.lane.b32.xlu0 %v1465, 2
    %v1535 = vpop.permute.xlu0 %1534
    %1536 = vrot.lane.b32.xlu0 %v1467, 2
    %v1537 = vpop.permute.xlu0 %1536
    %1538 = vrot.lane.b32.xlu0 %v1469, 2
    %v1539 = vpop.permute.xlu0 %1538
    %1540 = vrot.lane.b32.xlu0 %v1471, 2
    %v1541 = vpop.permute.xlu0 %1540
    %1542 = vrot.lane.b32.xlu0 %v1473, 2
    %v1543 = vpop.permute.xlu0 %1542
    %1544 = vrot.lane.b32.xlu0 %v1475, 2
    %v1545 = vpop.permute.xlu0 %1544
    %1546 = vrot.lane.b32.xlu0 %v1477, 2
    %v1547 = vpop.permute.xlu0 %1546
    %1548 = vrot.lane.b32.xlu0 %v1448, 2
    %v1549 = vpop.permute.xlu0 %1548
    %1550 = vrot.lane.b32.xlu0 %v1450, 2
    %v1551 = vpop.permute.xlu0 %1550
    %1552 = vrot.lane.b32.xlu0 %v1452, 2
    %v1553 = vpop.permute.xlu0 %1552
    %1554 = vrot.lane.b32.xlu0 %v1454, 2
    %v1555 = vpop.permute.xlu0 %1554
    %1556 = vrot.lane.b32.xlu0 %v1456, 2
    %v1557 = vpop.permute.xlu0 %1556
    %1558 = vrot.lane.b32.xlu0 %v1458, 2
    %v1559 = vpop.permute.xlu0 %1558
    %1560 = vrot.lane.b32.xlu0 %v1460, 2
    %v1561 = vpop.permute.xlu0 %1560
    %1562 = vrot.lane.b32.xlu0 %v1462, 2
    %v1563 = vpop.permute.xlu0 %1562
    %1564 = vrot.lane.b32.xlu0 %v1464, 2
    %v1565 = vpop.permute.xlu0 %1564
    %1566 = vrot.lane.b32.xlu0 %v1466, 2
    %v1567 = vpop.permute.xlu0 %1566
    %1568 = vrot.lane.b32.xlu0 %v1468, 2
    %v1569 = vpop.permute.xlu0 %1568
    %1570 = vrot.lane.b32.xlu0 %v1470, 2
    %v1571 = vpop.permute.xlu0 %1570
    %1572 = vrot.lane.b32.xlu0 %v1472, 2
    %v1573 = vpop.permute.xlu0 %1572
    %1574 = vrot.lane.b32.xlu0 %v1474, 2
    %v1575 = vpop.permute.xlu0 %1574
    %1576 = vrot.lane.b32.xlu0 %v1476, 2
    %v1577 = vpop.permute.xlu0 %1576
    %1578 = vrot.lane.b32.xlu0 %v1478, 2
    %v1579 = vpop.permute.xlu0 %1578
    %vm1580 = vcmp.lt.s32.totalorder %v1480, 2
    %v1581 = vsel %vm1580, %v1517, %v1549
    %v1582 = vsel %vm1580, %v1519, %v1551
    %v1583 = vsel %vm1580, %v1521, %v1553
    %v1584 = vsel %vm1580, %v1523, %v1555
    %v1585 = vsel %vm1580, %v1525, %v1557
    %v1586 = vsel %vm1580, %v1527, %v1559
    %v1587 = vsel %vm1580, %v1529, %v1561
    %v1588 = vsel %vm1580, %v1531, %v1563
    %v1589 = vsel %vm1580, %v1533, %v1565
    %v1590 = vsel %vm1580, %v1535, %v1567
    %v1591 = vsel %vm1580, %v1537, %v1569
    %v1592 = vsel %vm1580, %v1539, %v1571
    %v1593 = vsel %vm1580, %v1541, %v1573
    %v1594 = vsel %vm1580, %v1543, %v1575
    %v1595 = vsel %vm1580, %v1545, %v1577
    %v1596 = vsel %vm1580, %v1547, %v1579
    %v1597 = vsel %vm1580, %v1549, %v1517
    %v1598 = vsel %vm1580, %v1551, %v1519
    %v1599 = vsel %vm1580, %v1553, %v1521
    %v1600 = vsel %vm1580, %v1555, %v1523
    %v1601 = vsel %vm1580, %v1557, %v1525
    %v1602 = vsel %vm1580, %v1559, %v1527
    %v1603 = vsel %vm1580, %v1561, %v1529
    %v1604 = vsel %vm1580, %v1563, %v1531
    %v1605 = vsel %vm1580, %v1565, %v1533
    %v1606 = vsel %vm1580, %v1567, %v1535
    %v1607 = vsel %vm1580, %v1569, %v1537
    %v1608 = vsel %vm1580, %v1571, %v1539
    %v1609 = vsel %vm1580, %v1573, %v1541
    %v1610 = vsel %vm1580, %v1575, %v1543
    %v1611 = vsel %vm1580, %v1577, %v1545
    %v1612 = vsel %vm1580, %v1579, %v1547
    %v1613 = vadd.s32 %v1480, 4294967294
    %v1614 = vadd.s32 %v1481, 4294967294
    %vm1615 = vcmp.ge.s32.totalorder %v1613, 0
    %vm1616 = vcmp.ge.s32.totalorder %v1614, 0
    %vm1617 = vcmp.lt.s32.totalorder %v1613, 256
    %vm1618 = vcmp.lt.s32.totalorder %v1614, 256
    %vm1619 = vmand %vm1615, %vm1617
    %vm1620 = vmand %vm1616, %vm1618
    %s1621 = sld [smem:[#allocation6]]
    %v1622 = vsel %vm1619, %v1597, 0.0
    %v1623 = vsel %vm1620, %v1581, 0.0
    %v1624 = vsel %vm1619, %v1598, 0.0
    %v1625 = vsel %vm1620, %v1582, 0.0
    %v1626 = vsel %vm1619, %v1599, 0.0
    %v1627 = vsel %vm1620, %v1583, 0.0
    %v1628 = vsel %vm1619, %v1600, 0.0
    %v1629 = vsel %vm1620, %v1584, 0.0
    %v1630 = vsel %vm1619, %v1601, 0.0
    %v1631 = vsel %vm1620, %v1585, 0.0
    %v1632 = vsel %vm1619, %v1602, 0.0
    %v1633 = vsel %vm1620, %v1586, 0.0
    %v1634 = vsel %vm1619, %v1603, 0.0
    %v1635 = vsel %vm1620, %v1587, 0.0
    %v1636 = vsel %vm1619, %v1604, 0.0
    %v1637 = vsel %vm1620, %v1588, 0.0
    %v1638 = vsel %vm1619, %v1605, 0.0
    %v1639 = vsel %vm1620, %v1589, 0.0
    %v1640 = vsel %vm1619, %v1606, 0.0
    %v1641 = vsel %vm1620, %v1590, 0.0
    %v1642 = vsel %vm1619, %v1607, 0.0
    %v1643 = vsel %vm1620, %v1591, 0.0
    %v1644 = vsel %vm1619, %v1608, 0.0
    %v1645 = vsel %vm1620, %v1592, 0.0
    %v1646 = vsel %vm1619, %v1609, 0.0
    %v1647 = vsel %vm1620, %v1593, 0.0
    %v1648 = vsel %vm1619, %v1610, 0.0
    %v1649 = vsel %vm1620, %v1594, 0.0
    %v1650 = vsel %vm1619, %v1611, 0.0
    %v1651 = vsel %vm1620, %v1595, 0.0
    %v1652 = vsel %vm1619, %v1612, 0.0
    %v1653 = vsel %vm1620, %v1596, 0.0
    %v1654 = vstv %s1621
    %v1655 = vmul.f32 %v1654, %v1622
    %v1656 = vmul.f32 %v1654, %v1623
    %v1657 = vmul.f32 %v1654, %v1624
    %v1658 = vmul.f32 %v1654, %v1625
    %v1659 = vmul.f32 %v1654, %v1626
    %v1660 = vmul.f32 %v1654, %v1627
    %v1661 = vmul.f32 %v1654, %v1628
    %v1662 = vmul.f32 %v1654, %v1629
    %v1663 = vmul.f32 %v1654, %v1630
    %v1664 = vmul.f32 %v1654, %v1631
    %v1665 = vmul.f32 %v1654, %v1632
    %v1666 = vmul.f32 %v1654, %v1633
    %v1667 = vmul.f32 %v1654, %v1634
    %v1668 = vmul.f32 %v1654, %v1635
    %v1669 = vmul.f32 %v1654, %v1636
    %v1670 = vmul.f32 %v1654, %v1637
    %v1671 = vmul.f32 %v1654, %v1638
    %v1672 = vmul.f32 %v1654, %v1639
    %v1673 = vmul.f32 %v1654, %v1640
    %v1674 = vmul.f32 %v1654, %v1641
    %v1675 = vmul.f32 %v1654, %v1642
    %v1676 = vmul.f32 %v1654, %v1643
    %v1677 = vmul.f32 %v1654, %v1644
    %v1678 = vmul.f32 %v1654, %v1645
    %v1679 = vmul.f32 %v1654, %v1646
    %v1680 = vmul.f32 %v1654, %v1647
    %v1681 = vmul.f32 %v1654, %v1648
    %v1682 = vmul.f32 %v1654, %v1649
    %v1683 = vmul.f32 %v1654, %v1650
    %v1684 = vmul.f32 %v1654, %v1651
    %v1685 = vmul.f32 %v1654, %v1652
    %v1686 = vmul.f32 %v1654, %v1653
    %v1687 = vadd.f32 %v1484, %v1655
    %v1688 = vadd.f32 %v1485, %v1656
    %v1689 = vadd.f32 %v1486, %v1657
    %v1690 = vadd.f32 %v1487, %v1658
    %v1691 = vadd.f32 %v1488, %v1659
    %v1692 = vadd.f32 %v1489, %v1660
    %v1693 = vadd.f32 %v1490, %v1661
    %v1694 = vadd.f32 %v1491, %v1662
    %v1695 = vadd.f32 %v1492, %v1663
    %v1696 = vadd.f32 %v1493, %v1664
    %v1697 = vadd.f32 %v1494, %v1665
    %v1698 = vadd.f32 %v1495, %v1666
    %v1699 = vadd.f32 %v1496, %v1667
    %v1700 = vadd.f32 %v1497, %v1668
    %v1701 = vadd.f32 %v1498, %v1669
    %v1702 = vadd.f32 %v1499, %v1670
    %v1703 = vadd.f32 %v1500, %v1671
    %v1704 = vadd.f32 %v1501, %v1672
    %v1705 = vadd.f32 %v1502, %v1673
    %v1706 = vadd.f32 %v1503, %v1674
    %v1707 = vadd.f32 %v1504, %v1675
    %v1708 = vadd.f32 %v1505, %v1676
    %v1709 = vadd.f32 %v1506, %v1677
    %v1710 = vadd.f32 %v1507, %v1678
    %v1711 = vadd.f32 %v1508, %v1679
    %v1712 = vadd.f32 %v1509, %v1680
    %v1713 = vadd.f32 %v1510, %v1681
    %v1714 = vadd.f32 %v1511, %v1682
    %v1715 = vadd.f32 %v1512, %v1683
    %v1716 = vadd.f32 %v1513, %v1684
    %v1717 = vadd.f32 %v1514, %v1685
    %v1718 = vadd.f32 %v1515, %v1686
    %1719 = vrot.lane.b32.xlu0 %v1447, 1
    %v1720 = vpop.permute.xlu0 %1719
    %1721 = vrot.lane.b32.xlu0 %v1449, 1
    %v1722 = vpop.permute.xlu0 %1721
    %1723 = vrot.lane.b32.xlu0 %v1451, 1
    %v1724 = vpop.permute.xlu0 %1723
    %1725 = vrot.lane.b32.xlu0 %v1453, 1
    %v1726 = vpop.permute.xlu0 %1725
    %1727 = vrot.lane.b32.xlu0 %v1455, 1
    %v1728 = vpop.permute.xlu0 %1727
    %1729 = vrot.lane.b32.xlu0 %v1457, 1
    %v1730 = vpop.permute.xlu0 %1729
    %1731 = vrot.lane.b32.xlu0 %v1459, 1
    %v1732 = vpop.permute.xlu0 %1731
    %1733 = vrot.lane.b32.xlu0 %v1461, 1
    %v1734 = vpop.permute.xlu0 %1733
    %1735 = vrot.lane.b32.xlu0 %v1463, 1
    %v1736 = vpop.permute.xlu0 %1735
    %1737 = vrot.lane.b32.xlu0 %v1465, 1
    %v1738 = vpop.permute.xlu0 %1737
    %1739 = vrot.lane.b32.xlu0 %v1467, 1
    %v1740 = vpop.permute.xlu0 %1739
    %1741 = vrot.lane.b32.xlu0 %v1469, 1
    %v1742 = vpop.permute.xlu0 %1741
    %1743 = vrot.lane.b32.xlu0 %v1471, 1
    %v1744 = vpop.permute.xlu0 %1743
    %1745 = vrot.lane.b32.xlu0 %v1473, 1
    %v1746 = vpop.permute.xlu0 %1745
    %1747 = vrot.lane.b32.xlu0 %v1475, 1
    %v1748 = vpop.permute.xlu0 %1747
    %1749 = vrot.lane.b32.xlu0 %v1477, 1
    %v1750 = vpop.permute.xlu0 %1749
    %1751 = vrot.lane.b32.xlu0 %v1448, 1
    %v1752 = vpop.permute.xlu0 %1751
    %1753 = vrot.lane.b32.xlu0 %v1450, 1
    %v1754 = vpop.permute.xlu0 %1753
    %1755 = vrot.lane.b32.xlu0 %v1452, 1
    %v1756 = vpop.permute.xlu0 %1755
    %1757 = vrot.lane.b32.xlu0 %v1454, 1
    %v1758 = vpop.permute.xlu0 %1757
    %1759 = vrot.lane.b32.xlu0 %v1456, 1
    %v1760 = vpop.permute.xlu0 %1759
    %1761 = vrot.lane.b32.xlu0 %v1458, 1
    %v1762 = vpop.permute.xlu0 %1761
    %1763 = vrot.lane.b32.xlu0 %v1460, 1
    %v1764 = vpop.permute.xlu0 %1763
    %1765 = vrot.lane.b32.xlu0 %v1462, 1
    %v1766 = vpop.permute.xlu0 %1765
    %1767 = vrot.lane.b32.xlu0 %v1464, 1
    %v1768 = vpop.permute.xlu0 %1767
    %1769 = vrot.lane.b32.xlu0 %v1466, 1
    %v1770 = vpop.permute.xlu0 %1769
    %1771 = vrot.lane.b32.xlu0 %v1468, 1
    %v1772 = vpop.permute.xlu0 %1771
    %1773 = vrot.lane.b32.xlu0 %v1470, 1
    %v1774 = vpop.permute.xlu0 %1773
    %1775 = vrot.lane.b32.xlu0 %v1472, 1
    %v1776 = vpop.permute.xlu0 %1775
    %1777 = vrot.lane.b32.xlu0 %v1474, 1
    %v1778 = vpop.permute.xlu0 %1777
    %1779 = vrot.lane.b32.xlu0 %v1476, 1
    %v1780 = vpop.permute.xlu0 %1779
    %1781 = vrot.lane.b32.xlu0 %v1478, 1
    %v1782 = vpop.permute.xlu0 %1781
    %vm1783 = vcmp.lt.s32.totalorder %v1480, 1
    %v1784 = vsel %vm1783, %v1720, %v1752
    %v1785 = vsel %vm1783, %v1722, %v1754
    %v1786 = vsel %vm1783, %v1724, %v1756
    %v1787 = vsel %vm1783, %v1726, %v1758
    %v1788 = vsel %vm1783, %v1728, %v1760
    %v1789 = vsel %vm1783, %v1730, %v1762
    %v1790 = vsel %vm1783, %v1732, %v1764
    %v1791 = vsel %vm1783, %v1734, %v1766
    %v1792 = vsel %vm1783, %v1736, %v1768
    %v1793 = vsel %vm1783, %v1738, %v1770
    %v1794 = vsel %vm1783, %v1740, %v1772
    %v1795 = vsel %vm1783, %v1742, %v1774
    %v1796 = vsel %vm1783, %v1744, %v1776
    %v1797 = vsel %vm1783, %v1746, %v1778
    %v1798 = vsel %vm1783, %v1748, %v1780
    %v1799 = vsel %vm1783, %v1750, %v1782
    %v1800 = vsel %vm1783, %v1752, %v1720
    %v1801 = vsel %vm1783, %v1754, %v1722
    %v1802 = vsel %vm1783, %v1756, %v1724
    %v1803 = vsel %vm1783, %v1758, %v1726
    %v1804 = vsel %vm1783, %v1760, %v1728
    %v1805 = vsel %vm1783, %v1762, %v1730
    %v1806 = vsel %vm1783, %v1764, %v1732
    %v1807 = vsel %vm1783, %v1766, %v1734
    %v1808 = vsel %vm1783, %v1768, %v1736
    %v1809 = vsel %vm1783, %v1770, %v1738
    %v1810 = vsel %vm1783, %v1772, %v1740
    %v1811 = vsel %vm1783, %v1774, %v1742
    %v1812 = vsel %vm1783, %v1776, %v1744
    %v1813 = vsel %vm1783, %v1778, %v1746
    %v1814 = vsel %vm1783, %v1780, %v1748
    %v1815 = vsel %vm1783, %v1782, %v1750
    %v1816 = vadd.s32 %v1480, 4294967295
    %v1817 = vadd.s32 %v1481, 4294967295
    %vm1818 = vcmp.ge.s32.totalorder %v1816, 0
    %vm1819 = vcmp.ge.s32.totalorder %v1817, 0
    %vm1820 = vcmp.lt.s32.totalorder %v1816, 256
    %vm1821 = vcmp.lt.s32.totalorder %v1817, 256
    %vm1822 = vmand %vm1818, %vm1820
    %vm1823 = vmand %vm1819, %vm1821
    %s1824 = sld [smem:[#allocation6 + $0x1]]
    %v1825 = vsel %vm1822, %v1800, 0.0
    %v1826 = vsel %vm1823, %v1784, 0.0
    %v1827 = vsel %vm1822, %v1801, 0.0
    %v1828 = vsel %vm1823, %v1785, 0.0
    %v1829 = vsel %vm1822, %v1802, 0.0
    %v1830 = vsel %vm1823, %v1786, 0.0
    %v1831 = vsel %vm1822, %v1803, 0.0
    %v1832 = vsel %vm1823, %v1787, 0.0
    %v1833 = vsel %vm1822, %v1804, 0.0
    %v1834 = vsel %vm1823, %v1788, 0.0
    %v1835 = vsel %vm1822, %v1805, 0.0
    %v1836 = vsel %vm1823, %v1789, 0.0
    %v1837 = vsel %vm1822, %v1806, 0.0
    %v1838 = vsel %vm1823, %v1790, 0.0
    %v1839 = vsel %vm1822, %v1807, 0.0
    %v1840 = vsel %vm1823, %v1791, 0.0
    %v1841 = vsel %vm1822, %v1808, 0.0
    %v1842 = vsel %vm1823, %v1792, 0.0
    %v1843 = vsel %vm1822, %v1809, 0.0
    %v1844 = vsel %vm1823, %v1793, 0.0
    %v1845 = vsel %vm1822, %v1810, 0.0
    %v1846 = vsel %vm1823, %v1794, 0.0
    %v1847 = vsel %vm1822, %v1811, 0.0
    %v1848 = vsel %vm1823, %v1795, 0.0
    %v1849 = vsel %vm1822, %v1812, 0.0
    %v1850 = vsel %vm1823, %v1796, 0.0
    %v1851 = vsel %vm1822, %v1813, 0.0
    %v1852 = vsel %vm1823, %v1797, 0.0
    %v1853 = vsel %vm1822, %v1814, 0.0
    %v1854 = vsel %vm1823, %v1798, 0.0
    %v1855 = vsel %vm1822, %v1815, 0.0
    %v1856 = vsel %vm1823, %v1799, 0.0
    %v1857 = vstv %s1824
    %v1858 = vmul.f32 %v1857, %v1825
    %v1859 = vmul.f32 %v1857, %v1826
    %v1860 = vmul.f32 %v1857, %v1827
    %v1861 = vmul.f32 %v1857, %v1828
    %v1862 = vmul.f32 %v1857, %v1829
    %v1863 = vmul.f32 %v1857, %v1830
    %v1864 = vmul.f32 %v1857, %v1831
    %v1865 = vmul.f32 %v1857, %v1832
    %v1866 = vmul.f32 %v1857, %v1833
    %v1867 = vmul.f32 %v1857, %v1834
    %v1868 = vmul.f32 %v1857, %v1835
    %v1869 = vmul.f32 %v1857, %v1836
    %v1870 = vmul.f32 %v1857, %v1837
    %v1871 = vmul.f32 %v1857, %v1838
    %v1872 = vmul.f32 %v1857, %v1839
    %v1873 = vmul.f32 %v1857, %v1840
    %v1874 = vmul.f32 %v1857, %v1841
    %v1875 = vmul.f32 %v1857, %v1842
    %v1876 = vmul.f32 %v1857, %v1843
    %v1877 = vmul.f32 %v1857, %v1844
    %v1878 = vmul.f32 %v1857, %v1845
    %v1879 = vmul.f32 %v1857, %v1846
    %v1880 = vmul.f32 %v1857, %v1847
    %v1881 = vmul.f32 %v1857, %v1848
    %v1882 = vmul.f32 %v1857, %v1849
    %v1883 = vmul.f32 %v1857, %v1850
    %v1884 = vmul.f32 %v1857, %v1851
    %v1885 = vmul.f32 %v1857, %v1852
    %v1886 = vmul.f32 %v1857, %v1853
    %v1887 = vmul.f32 %v1857, %v1854
    %v1888 = vmul.f32 %v1857, %v1855
    %v1889 = vmul.f32 %v1857, %v1856
    %v1890 = vadd.f32 %v1687, %v1858
    %v1891 = vadd.f32 %v1688, %v1859
    %v1892 = vadd.f32 %v1689, %v1860
    %v1893 = vadd.f32 %v1690, %v1861
    %v1894 = vadd.f32 %v1691, %v1862
    %v1895 = vadd.f32 %v1692, %v1863
    %v1896 = vadd.f32 %v1693, %v1864
    %v1897 = vadd.f32 %v1694, %v1865
    %v1898 = vadd.f32 %v1695, %v1866
    %v1899 = vadd.f32 %v1696, %v1867
    %v1900 = vadd.f32 %v1697, %v1868
    %v1901 = vadd.f32 %v1698, %v1869
    %v1902 = vadd.f32 %v1699, %v1870
    %v1903 = vadd.f32 %v1700, %v1871
    %v1904 = vadd.f32 %v1701, %v1872
    %v1905 = vadd.f32 %v1702, %v1873
    %v1906 = vadd.f32 %v1703, %v1874
    %v1907 = vadd.f32 %v1704, %v1875
    %v1908 = vadd.f32 %v1705, %v1876
    %v1909 = vadd.f32 %v1706, %v1877
    %v1910 = vadd.f32 %v1707, %v1878
    %v1911 = vadd.f32 %v1708, %v1879
    %v1912 = vadd.f32 %v1709, %v1880
    %v1913 = vadd.f32 %v1710, %v1881
    %v1914 = vadd.f32 %v1711, %v1882
    %v1915 = vadd.f32 %v1712, %v1883
    %v1916 = vadd.f32 %v1713, %v1884
    %v1917 = vadd.f32 %v1714, %v1885
    %v1918 = vadd.f32 %v1715, %v1886
    %v1919 = vadd.f32 %v1716, %v1887
    %v1920 = vadd.f32 %v1717, %v1888
    %v1921 = vadd.f32 %v1718, %v1889
    %1922 = vrot.lane.b32.xlu0 %v1447, 127
    %v1923 = vpop.permute.xlu0 %1922
    %1924 = vrot.lane.b32.xlu0 %v1449, 127
    %v1925 = vpop.permute.xlu0 %1924
    %1926 = vrot.lane.b32.xlu0 %v1451, 127
    %v1927 = vpop.permute.xlu0 %1926
    %1928 = vrot.lane.b32.xlu0 %v1453, 127
    %v1929 = vpop.permute.xlu0 %1928
    %1930 = vrot.lane.b32.xlu0 %v1455, 127
    %v1931 = vpop.permute.xlu0 %1930
    %1932 = vrot.lane.b32.xlu0 %v1457, 127
    %v1933 = vpop.permute.xlu0 %1932
    %1934 = vrot.lane.b32.xlu0 %v1459, 127
    %v1935 = vpop.permute.xlu0 %1934
    %1936 = vrot.lane.b32.xlu0 %v1461, 127
    %v1937 = vpop.permute.xlu0 %1936
    %1938 = vrot.lane.b32.xlu0 %v1463, 127
    %v1939 = vpop.permute.xlu0 %1938
    %1940 = vrot.lane.b32.xlu0 %v1465, 127
    %v1941 = vpop.permute.xlu0 %1940
    %1942 = vrot.lane.b32.xlu0 %v1467, 127
    %v1943 = vpop.permute.xlu0 %1942
    %1944 = vrot.lane.b32.xlu0 %v1469, 127
    %v1945 = vpop.permute.xlu0 %1944
    %1946 = vrot.lane.b32.xlu0 %v1471, 127
    %v1947 = vpop.permute.xlu0 %1946
    %1948 = vrot.lane.b32.xlu0 %v1473, 127
    %v1949 = vpop.permute.xlu0 %1948
    %1950 = vrot.lane.b32.xlu0 %v1475, 127
    %v1951 = vpop.permute.xlu0 %1950
    %1952 = vrot.lane.b32.xlu0 %v1477, 127
    %v1953 = vpop.permute.xlu0 %1952
    %1954 = vrot.lane.b32.xlu0 %v1448, 127
    %v1955 = vpop.permute.xlu0 %1954
    %1956 = vrot.lane.b32.xlu0 %v1450, 127
    %v1957 = vpop.permute.xlu0 %1956
    %1958 = vrot.lane.b32.xlu0 %v1452, 127
    %v1959 = vpop.permute.xlu0 %1958
    %1960 = vrot.lane.b32.xlu0 %v1454, 127
    %v1961 = vpop.permute.xlu0 %1960
    %1962 = vrot.lane.b32.xlu0 %v1456, 127
    %v1963 = vpop.permute.xlu0 %1962
    %1964 = vrot.lane.b32.xlu0 %v1458, 127
    %v1965 = vpop.permute.xlu0 %1964
    %1966 = vrot.lane.b32.xlu0 %v1460, 127
    %v1967 = vpop.permute.xlu0 %1966
    %1968 = vrot.lane.b32.xlu0 %v1462, 127
    %v1969 = vpop.permute.xlu0 %1968
    %1970 = vrot.lane.b32.xlu0 %v1464, 127
    %v1971 = vpop.permute.xlu0 %1970
    %1972 = vrot.lane.b32.xlu0 %v1466, 127
    %v1973 = vpop.permute.xlu0 %1972
    %1974 = vrot.lane.b32.xlu0 %v1468, 127
    %v1975 = vpop.permute.xlu0 %1974
    %1976 = vrot.lane.b32.xlu0 %v1470, 127
    %v1977 = vpop.permute.xlu0 %1976
    %1978 = vrot.lane.b32.xlu0 %v1472, 127
    %v1979 = vpop.permute.xlu0 %1978
    %1980 = vrot.lane.b32.xlu0 %v1474, 127
    %v1981 = vpop.permute.xlu0 %1980
    %1982 = vrot.lane.b32.xlu0 %v1476, 127
    %v1983 = vpop.permute.xlu0 %1982
    %1984 = vrot.lane.b32.xlu0 %v1478, 127
    %v1985 = vpop.permute.xlu0 %1984
    %vm1986 = vcmp.lt.s32.totalorder %v1480, 127
    %v1987 = vsel %vm1986, %v1923, %v1955
    %v1988 = vsel %vm1986, %v1925, %v1957
    %v1989 = vsel %vm1986, %v1927, %v1959
    %v1990 = vsel %vm1986, %v1929, %v1961
    %v1991 = vsel %vm1986, %v1931, %v1963
    %v1992 = vsel %vm1986, %v1933, %v1965
    %v1993 = vsel %vm1986, %v1935, %v1967
    %v1994 = vsel %vm1986, %v1937, %v1969
    %v1995 = vsel %vm1986, %v1939, %v1971
    %v1996 = vsel %vm1986, %v1941, %v1973
    %v1997 = vsel %vm1986, %v1943, %v1975
    %v1998 = vsel %vm1986, %v1945, %v1977
    %v1999 = vsel %vm1986, %v1947, %v1979
    %v2000 = vsel %vm1986, %v1949, %v1981
    %v2001 = vsel %vm1986, %v1951, %v1983
    %v2002 = vsel %vm1986, %v1953, %v1985
    %v2003 = vsel %vm1986, %v1955, %v1923
    %v2004 = vsel %vm1986, %v1957, %v1925
    %v2005 = vsel %vm1986, %v1959, %v1927
    %v2006 = vsel %vm1986, %v1961, %v1929
    %v2007 = vsel %vm1986, %v1963, %v1931
    %v2008 = vsel %vm1986, %v1965, %v1933
    %v2009 = vsel %vm1986, %v1967, %v1935
    %v2010 = vsel %vm1986, %v1969, %v1937
    %v2011 = vsel %vm1986, %v1971, %v1939
    %v2012 = vsel %vm1986, %v1973, %v1941
    %v2013 = vsel %vm1986, %v1975, %v1943
    %v2014 = vsel %vm1986, %v1977, %v1945
    %v2015 = vsel %vm1986, %v1979, %v1947
    %v2016 = vsel %vm1986, %v1981, %v1949
    %v2017 = vsel %vm1986, %v1983, %v1951
    %v2018 = vsel %vm1986, %v1985, %v1953
    %v2019 = vadd.s32 %v1480, 1
    %v2020 = vadd.s32 %v1481, 1
    %vm2021 = vcmp.ge.s32.totalorder %v2019, 0
    %vm2022 = vcmp.ge.s32.totalorder %v2020, 0
    %vm2023 = vcmp.lt.s32.totalorder %v2019, 256
    %vm2024 = vcmp.lt.s32.totalorder %v2020, 256
    %vm2025 = vmand %vm2021, %vm2023
    %vm2026 = vmand %vm2022, %vm2024
    %s2027 = sld [smem:[#allocation6 + $0x3]]
    %v2028 = vsel %vm2025, %v1987, 0.0
    %v2029 = vsel %vm2026, %v2003, 0.0
    %v2030 = vsel %vm2025, %v1988, 0.0
    %v2031 = vsel %vm2026, %v2004, 0.0
    %v2032 = vsel %vm2025, %v1989, 0.0
    %v2033 = vsel %vm2026, %v2005, 0.0
    %v2034 = vsel %vm2025, %v1990, 0.0
    %v2035 = vsel %vm2026, %v2006, 0.0
    %v2036 = vsel %vm2025, %v1991, 0.0
    %v2037 = vsel %vm2026, %v2007, 0.0
    %v2038 = vsel %vm2025, %v1992, 0.0
    %v2039 = vsel %vm2026, %v2008, 0.0
    %v2040 = vsel %vm2025, %v1993, 0.0
    %v2041 = vsel %vm2026, %v2009, 0.0
    %v2042 = vsel %vm2025, %v1994, 0.0
    %v2043 = vsel %vm2026, %v2010, 0.0
    %v2044 = vsel %vm2025, %v1995, 0.0
    %v2045 = vsel %vm2026, %v2011, 0.0
    %v2046 = vsel %vm2025, %v1996, 0.0
    %v2047 = vsel %vm2026, %v2012, 0.0
    %v2048 = vsel %vm2025, %v1997, 0.0
    %v2049 = vsel %vm2026, %v2013, 0.0
    %v2050 = vsel %vm2025, %v1998, 0.0
    %v2051 = vsel %vm2026, %v2014, 0.0
    %v2052 = vsel %vm2025, %v1999, 0.0
    %v2053 = vsel %vm2026, %v2015, 0.0
    %v2054 = vsel %vm2025, %v2000, 0.0
    %v2055 = vsel %vm2026, %v2016, 0.0
    %v2056 = vsel %vm2025, %v2001, 0.0
    %v2057 = vsel %vm2026, %v2017, 0.0
    %v2058 = vsel %vm2025, %v2002, 0.0
    %v2059 = vsel %vm2026, %v2018, 0.0
    %v2060 = vstv %s2027
    %v2061 = vmul.f32 %v2060, %v2028
    %v2062 = vmul.f32 %v2060, %v2029
    %v2063 = vmul.f32 %v2060, %v2030
    %v2064 = vmul.f32 %v2060, %v2031
    %v2065 = vmul.f32 %v2060, %v2032
    %v2066 = vmul.f32 %v2060, %v2033
    %v2067 = vmul.f32 %v2060, %v2034
    %v2068 = vmul.f32 %v2060, %v2035
    %v2069 = vmul.f32 %v2060, %v2036
    %v2070 = vmul.f32 %v2060, %v2037
    %v2071 = vmul.f32 %v2060, %v2038
    %v2072 = vmul.f32 %v2060, %v2039
    %v2073 = vmul.f32 %v2060, %v2040
    %v2074 = vmul.f32 %v2060, %v2041
    %v2075 = vmul.f32 %v2060, %v2042
    %v2076 = vmul.f32 %v2060, %v2043
    %v2077 = vmul.f32 %v2060, %v2044
    %v2078 = vmul.f32 %v2060, %v2045
    %v2079 = vmul.f32 %v2060, %v2046
    %v2080 = vmul.f32 %v2060, %v2047
    %v2081 = vmul.f32 %v2060, %v2048
    %v2082 = vmul.f32 %v2060, %v2049
    %v2083 = vmul.f32 %v2060, %v2050
    %v2084 = vmul.f32 %v2060, %v2051
    %v2085 = vmul.f32 %v2060, %v2052
    %v2086 = vmul.f32 %v2060, %v2053
    %v2087 = vmul.f32 %v2060, %v2054
    %v2088 = vmul.f32 %v2060, %v2055
    %v2089 = vmul.f32 %v2060, %v2056
    %v2090 = vmul.f32 %v2060, %v2057
    %v2091 = vmul.f32 %v2060, %v2058
    %v2092 = vmul.f32 %v2060, %v2059
    %v2093 = vadd.f32 %v1890, %v2061
    %v2094 = vadd.f32 %v1891, %v2062
    %v2095 = vadd.f32 %v1892, %v2063
    %v2096 = vadd.f32 %v1893, %v2064
    %v2097 = vadd.f32 %v1894, %v2065
    %v2098 = vadd.f32 %v1895, %v2066
    %v2099 = vadd.f32 %v1896, %v2067
    %v2100 = vadd.f32 %v1897, %v2068
    %v2101 = vadd.f32 %v1898, %v2069
    %v2102 = vadd.f32 %v1899, %v2070
    %v2103 = vadd.f32 %v1900, %v2071
    %v2104 = vadd.f32 %v1901, %v2072
    %v2105 = vadd.f32 %v1902, %v2073
    %v2106 = vadd.f32 %v1903, %v2074
    %v2107 = vadd.f32 %v1904, %v2075
    %v2108 = vadd.f32 %v1905, %v2076
    %v2109 = vadd.f32 %v1906, %v2077
    %v2110 = vadd.f32 %v1907, %v2078
    %v2111 = vadd.f32 %v1908, %v2079
    %v2112 = vadd.f32 %v1909, %v2080
    %v2113 = vadd.f32 %v1910, %v2081
    %v2114 = vadd.f32 %v1911, %v2082
    %v2115 = vadd.f32 %v1912, %v2083
    %v2116 = vadd.f32 %v1913, %v2084
    %v2117 = vadd.f32 %v1914, %v2085
    %v2118 = vadd.f32 %v1915, %v2086
    %v2119 = vadd.f32 %v1916, %v2087
    %v2120 = vadd.f32 %v1917, %v2088
    %v2121 = vadd.f32 %v1918, %v2089
    %v2122 = vadd.f32 %v1919, %v2090
    %v2123 = vadd.f32 %v1920, %v2091
    %v2124 = vadd.f32 %v1921, %v2092
    %2125 = vrot.lane.b32.xlu0 %v1447, 126
    %v2126 = vpop.permute.xlu0 %2125
    %2127 = vrot.lane.b32.xlu0 %v1449, 126
    %v2128 = vpop.permute.xlu0 %2127
    %2129 = vrot.lane.b32.xlu0 %v1451, 126
    %v2130 = vpop.permute.xlu0 %2129
    %2131 = vrot.lane.b32.xlu0 %v1453, 126
    %v2132 = vpop.permute.xlu0 %2131
    %2133 = vrot.lane.b32.xlu0 %v1455, 126
    %v2134 = vpop.permute.xlu0 %2133
    %2135 = vrot.lane.b32.xlu0 %v1457, 126
    %v2136 = vpop.permute.xlu0 %2135
    %2137 = vrot.lane.b32.xlu0 %v1459, 126
    %v2138 = vpop.permute.xlu0 %2137
    %2139 = vrot.lane.b32.xlu0 %v1461, 126
    %v2140 = vpop.permute.xlu0 %2139
    %2141 = vrot.lane.b32.xlu0 %v1463, 126
    %v2142 = vpop.permute.xlu0 %2141
    %2143 = vrot.lane.b32.xlu0 %v1465, 126
    %v2144 = vpop.permute.xlu0 %2143
    %2145 = vrot.lane.b32.xlu0 %v1467, 126
    %v2146 = vpop.permute.xlu0 %2145
    %2147 = vrot.lane.b32.xlu0 %v1469, 126
    %v2148 = vpop.permute.xlu0 %2147
    %2149 = vrot.lane.b32.xlu0 %v1471, 126
    %v2150 = vpop.permute.xlu0 %2149
    %2151 = vrot.lane.b32.xlu0 %v1473, 126
    %v2152 = vpop.permute.xlu0 %2151
    %2153 = vrot.lane.b32.xlu0 %v1475, 126
    %v2154 = vpop.permute.xlu0 %2153
    %2155 = vrot.lane.b32.xlu0 %v1477, 126
    %v2156 = vpop.permute.xlu0 %2155
    %2157 = vrot.lane.b32.xlu0 %v1448, 126
    %v2158 = vpop.permute.xlu0 %2157
    %2159 = vrot.lane.b32.xlu0 %v1450, 126
    %v2160 = vpop.permute.xlu0 %2159
    %2161 = vrot.lane.b32.xlu0 %v1452, 126
    %v2162 = vpop.permute.xlu0 %2161
    %2163 = vrot.lane.b32.xlu0 %v1454, 126
    %v2164 = vpop.permute.xlu0 %2163
    %2165 = vrot.lane.b32.xlu0 %v1456, 126
    %v2166 = vpop.permute.xlu0 %2165
    %2167 = vrot.lane.b32.xlu0 %v1458, 126
    %v2168 = vpop.permute.xlu0 %2167
    %2169 = vrot.lane.b32.xlu0 %v1460, 126
    %v2170 = vpop.permute.xlu0 %2169
    %2171 = vrot.lane.b32.xlu0 %v1462, 126
    %v2172 = vpop.permute.xlu0 %2171
    %2173 = vrot.lane.b32.xlu0 %v1464, 126
    %v2174 = vpop.permute.xlu0 %2173
    %2175 = vrot.lane.b32.xlu0 %v1466, 126
    %v2176 = vpop.permute.xlu0 %2175
    %2177 = vrot.lane.b32.xlu0 %v1468, 126
    %v2178 = vpop.permute.xlu0 %2177
    %2179 = vrot.lane.b32.xlu0 %v1470, 126
    %v2180 = vpop.permute.xlu0 %2179
    %2181 = vrot.lane.b32.xlu0 %v1472, 126
    %v2182 = vpop.permute.xlu0 %2181
    %2183 = vrot.lane.b32.xlu0 %v1474, 126
    %v2184 = vpop.permute.xlu0 %2183
    %2185 = vrot.lane.b32.xlu0 %v1476, 126
    %v2186 = vpop.permute.xlu0 %2185
    %2187 = vrot.lane.b32.xlu0 %v1478, 126
    %v2188 = vpop.permute.xlu0 %2187
    %vm2189 = vcmp.lt.s32.totalorder %v1480, 126
    %v2190 = vsel %vm2189, %v2126, %v2158
    %v2191 = vsel %vm2189, %v2128, %v2160
    %v2192 = vsel %vm2189, %v2130, %v2162
    %v2193 = vsel %vm2189, %v2132, %v2164
    %v2194 = vsel %vm2189, %v2134, %v2166
    %v2195 = vsel %vm2189, %v2136, %v2168
    %v2196 = vsel %vm2189, %v2138, %v2170
    %v2197 = vsel %vm2189, %v2140, %v2172
    %v2198 = vsel %vm2189, %v2142, %v2174
    %v2199 = vsel %vm2189, %v2144, %v2176
    %v2200 = vsel %vm2189, %v2146, %v2178
    %v2201 = vsel %vm2189, %v2148, %v2180
    %v2202 = vsel %vm2189, %v2150, %v2182
    %v2203 = vsel %vm2189, %v2152, %v2184
    %v2204 = vsel %vm2189, %v2154, %v2186
    %v2205 = vsel %vm2189, %v2156, %v2188
    %v2206 = vsel %vm2189, %v2158, %v2126
    %v2207 = vsel %vm2189, %v2160, %v2128
    %v2208 = vsel %vm2189, %v2162, %v2130
    %v2209 = vsel %vm2189, %v2164, %v2132
    %v2210 = vsel %vm2189, %v2166, %v2134
    %v2211 = vsel %vm2189, %v2168, %v2136
    %v2212 = vsel %vm2189, %v2170, %v2138
    %v2213 = vsel %vm2189, %v2172, %v2140
    %v2214 = vsel %vm2189, %v2174, %v2142
    %v2215 = vsel %vm2189, %v2176, %v2144
    %v2216 = vsel %vm2189, %v2178, %v2146
    %v2217 = vsel %vm2189, %v2180, %v2148
    %v2218 = vsel %vm2189, %v2182, %v2150
    %v2219 = vsel %vm2189, %v2184, %v2152
    %v2220 = vsel %vm2189, %v2186, %v2154
    %v2221 = vsel %vm2189, %v2188, %v2156
    %v2222 = vadd.s32 %v1480, 2
    %v2223 = vadd.s32 %v1481, 2
    %vm2224 = vcmp.ge.s32.totalorder %v2222, 0
    %vm2225 = vcmp.ge.s32.totalorder %v2223, 0
    %vm2226 = vcmp.lt.s32.totalorder %v2222, 256
    %vm2227 = vcmp.lt.s32.totalorder %v2223, 256
    %vm2228 = vmand %vm2224, %vm2226
    %vm2229 = vmand %vm2225, %vm2227
    %s2230 = sld [smem:[#allocation6 + $0x4]]
    %v2231 = vsel %vm2228, %v2190, 0.0
    %v2232 = vsel %vm2229, %v2206, 0.0
    %v2233 = vsel %vm2228, %v2191, 0.0
    %v2234 = vsel %vm2229, %v2207, 0.0
    %v2235 = vsel %vm2228, %v2192, 0.0
    %v2236 = vsel %vm2229, %v2208, 0.0
    %v2237 = vsel %vm2228, %v2193, 0.0
    %v2238 = vsel %vm2229, %v2209, 0.0
    %v2239 = vsel %vm2228, %v2194, 0.0
    %v2240 = vsel %vm2229, %v2210, 0.0
    %v2241 = vsel %vm2228, %v2195, 0.0
    %v2242 = vsel %vm2229, %v2211, 0.0
    %v2243 = vsel %vm2228, %v2196, 0.0
    %v2244 = vsel %vm2229, %v2212, 0.0
    %v2245 = vsel %vm2228, %v2197, 0.0
    %v2246 = vsel %vm2229, %v2213, 0.0
    %v2247 = vsel %vm2228, %v2198, 0.0
    %v2248 = vsel %vm2229, %v2214, 0.0
    %v2249 = vsel %vm2228, %v2199, 0.0
    %v2250 = vsel %vm2229, %v2215, 0.0
    %v2251 = vsel %vm2228, %v2200, 0.0
    %v2252 = vsel %vm2229, %v2216, 0.0
    %v2253 = vsel %vm2228, %v2201, 0.0
    %v2254 = vsel %vm2229, %v2217, 0.0
    %v2255 = vsel %vm2228, %v2202, 0.0
    %v2256 = vsel %vm2229, %v2218, 0.0
    %v2257 = vsel %vm2228, %v2203, 0.0
    %v2258 = vsel %vm2229, %v2219, 0.0
    %v2259 = vsel %vm2228, %v2204, 0.0
    %v2260 = vsel %vm2229, %v2220, 0.0
    %v2261 = vsel %vm2228, %v2205, 0.0
    %v2262 = vsel %vm2229, %v2221, 0.0
    %v2263 = vstv %s2230
    %v2264 = vmul.f32 %v2263, %v2231
    %v2265 = vmul.f32 %v2263, %v2232
    %v2266 = vmul.f32 %v2263, %v2233
    %v2267 = vmul.f32 %v2263, %v2234
    %v2268 = vmul.f32 %v2263, %v2235
    %v2269 = vmul.f32 %v2263, %v2236
    %v2270 = vmul.f32 %v2263, %v2237
    %v2271 = vmul.f32 %v2263, %v2238
    %v2272 = vmul.f32 %v2263, %v2239
    %v2273 = vmul.f32 %v2263, %v2240
    %v2274 = vmul.f32 %v2263, %v2241
    %v2275 = vmul.f32 %v2263, %v2242
    %v2276 = vmul.f32 %v2263, %v2243
    %v2277 = vmul.f32 %v2263, %v2244
    %v2278 = vmul.f32 %v2263, %v2245
    %v2279 = vmul.f32 %v2263, %v2246
    %v2280 = vmul.f32 %v2263, %v2247
    %v2281 = vmul.f32 %v2263, %v2248
    %v2282 = vmul.f32 %v2263, %v2249
    %v2283 = vmul.f32 %v2263, %v2250
    %v2284 = vmul.f32 %v2263, %v2251
    %v2285 = vmul.f32 %v2263, %v2252
    %v2286 = vmul.f32 %v2263, %v2253
    %v2287 = vmul.f32 %v2263, %v2254
    %v2288 = vmul.f32 %v2263, %v2255
    %v2289 = vmul.f32 %v2263, %v2256
    %v2290 = vmul.f32 %v2263, %v2257
    %v2291 = vmul.f32 %v2263, %v2258
    %v2292 = vmul.f32 %v2263, %v2259
    %v2293 = vmul.f32 %v2263, %v2260
    %v2294 = vmul.f32 %v2263, %v2261
    %v2295 = vmul.f32 %v2263, %v2262
    %v2296 = vadd.f32 %v2093, %v2264
    %v2297 = vadd.f32 %v2094, %v2265
    %v2298 = vadd.f32 %v2095, %v2266
    %v2299 = vadd.f32 %v2096, %v2267
    %v2300 = vadd.f32 %v2097, %v2268
    %v2301 = vadd.f32 %v2098, %v2269
    %v2302 = vadd.f32 %v2099, %v2270
    %v2303 = vadd.f32 %v2100, %v2271
    %v2304 = vadd.f32 %v2101, %v2272
    %v2305 = vadd.f32 %v2102, %v2273
    %v2306 = vadd.f32 %v2103, %v2274
    %v2307 = vadd.f32 %v2104, %v2275
    %v2308 = vadd.f32 %v2105, %v2276
    %v2309 = vadd.f32 %v2106, %v2277
    %v2310 = vadd.f32 %v2107, %v2278
    %v2311 = vadd.f32 %v2108, %v2279
    %v2312 = vadd.f32 %v2109, %v2280
    %v2313 = vadd.f32 %v2110, %v2281
    %v2314 = vadd.f32 %v2111, %v2282
    %v2315 = vadd.f32 %v2112, %v2283
    %v2316 = vadd.f32 %v2113, %v2284
    %v2317 = vadd.f32 %v2114, %v2285
    %v2318 = vadd.f32 %v2115, %v2286
    %v2319 = vadd.f32 %v2116, %v2287
    %v2320 = vadd.f32 %v2117, %v2288
    %v2321 = vadd.f32 %v2118, %v2289
    %v2322 = vadd.f32 %v2119, %v2290
    %v2323 = vadd.f32 %v2120, %v2291
    %v2324 = vadd.f32 %v2121, %v2292
    %v2325 = vadd.f32 %v2122, %v2293
    %v2326 = vadd.f32 %v2123, %v2294
    %v2327 = vadd.f32 %v2124, %v2295
    %s2328 = sld [smem:[#allocation2]]
    %v2329 = vstv %s2328
    %v2330 = vadd.f32 %v2296, %v2329
    %v2331 = vadd.f32 %v2297, %v2329
    %v2332 = vadd.f32 %v2298, %v2329
    %v2333 = vadd.f32 %v2299, %v2329
    %v2334 = vadd.f32 %v2300, %v2329
    %v2335 = vadd.f32 %v2301, %v2329
    %v2336 = vadd.f32 %v2302, %v2329
    %v2337 = vadd.f32 %v2303, %v2329
    %v2338 = vadd.f32 %v2304, %v2329
    %v2339 = vadd.f32 %v2305, %v2329
    %v2340 = vadd.f32 %v2306, %v2329
    %v2341 = vadd.f32 %v2307, %v2329
    %v2342 = vadd.f32 %v2308, %v2329
    %v2343 = vadd.f32 %v2309, %v2329
    %v2344 = vadd.f32 %v2310, %v2329
    %v2345 = vadd.f32 %v2311, %v2329
    %v2346 = vadd.f32 %v2312, %v2329
    %v2347 = vadd.f32 %v2313, %v2329
    %v2348 = vadd.f32 %v2314, %v2329
    %v2349 = vadd.f32 %v2315, %v2329
    %v2350 = vadd.f32 %v2316, %v2329
    %v2351 = vadd.f32 %v2317, %v2329
    %v2352 = vadd.f32 %v2318, %v2329
    %v2353 = vadd.f32 %v2319, %v2329
    %v2354 = vadd.f32 %v2320, %v2329
    %v2355 = vadd.f32 %v2321, %v2329
    %v2356 = vadd.f32 %v2322, %v2329
    %v2357 = vadd.f32 %v2323, %v2329
    %v2358 = vadd.f32 %v2324, %v2329
    %v2359 = vadd.f32 %v2325, %v2329
    %v2360 = vadd.f32 %v2326, %v2329
    %v2361 = vadd.f32 %v2327, %v2329
    %v2362 = vmax.f32 %v2330, 0.0
    %v2363 = vmax.f32 %v2331, 0.0
    %v2364 = vmax.f32 %v2332, 0.0
    %v2365 = vmax.f32 %v2333, 0.0
    %v2366 = vmax.f32 %v2334, 0.0
    %v2367 = vmax.f32 %v2335, 0.0
    %v2368 = vmax.f32 %v2336, 0.0
    %v2369 = vmax.f32 %v2337, 0.0
    %v2370 = vmax.f32 %v2338, 0.0
    %v2371 = vmax.f32 %v2339, 0.0
    %v2372 = vmax.f32 %v2340, 0.0
    %v2373 = vmax.f32 %v2341, 0.0
    %v2374 = vmax.f32 %v2342, 0.0
    %v2375 = vmax.f32 %v2343, 0.0
    %v2376 = vmax.f32 %v2344, 0.0
    %v2377 = vmax.f32 %v2345, 0.0
    %v2378 = vmax.f32 %v2346, 0.0
    %v2379 = vmax.f32 %v2347, 0.0
    %v2380 = vmax.f32 %v2348, 0.0
    %v2381 = vmax.f32 %v2349, 0.0
    %v2382 = vmax.f32 %v2350, 0.0
    %v2383 = vmax.f32 %v2351, 0.0
    %v2384 = vmax.f32 %v2352, 0.0
    %v2385 = vmax.f32 %v2353, 0.0
    %v2386 = vmax.f32 %v2354, 0.0
    %v2387 = vmax.f32 %v2355, 0.0
    %v2388 = vmax.f32 %v2356, 0.0
    %v2389 = vmax.f32 %v2357, 0.0
    %v2390 = vmax.f32 %v2358, 0.0
    %v2391 = vmax.f32 %v2359, 0.0
    %v2392 = vmax.f32 %v2360, 0.0
    %v2393 = vmax.f32 %v2361, 0.0
    %2394 = vrot.lane.b32.xlu0 %v2362, 127
    %v2395 = vpop.permute.xlu0 %2394
    %2396 = vrot.lane.b32.xlu0 %v2364, 127
    %v2397 = vpop.permute.xlu0 %2396
    %2398 = vrot.lane.b32.xlu0 %v2366, 127
    %v2399 = vpop.permute.xlu0 %2398
    %2400 = vrot.lane.b32.xlu0 %v2368, 127
    %v2401 = vpop.permute.xlu0 %2400
    %2402 = vrot.lane.b32.xlu0 %v2370, 127
    %v2403 = vpop.permute.xlu0 %2402
    %2404 = vrot.lane.b32.xlu0 %v2372, 127
    %v2405 = vpop.permute.xlu0 %2404
    %2406 = vrot.lane.b32.xlu0 %v2374, 127
    %v2407 = vpop.permute.xlu0 %2406
    %2408 = vrot.lane.b32.xlu0 %v2376, 127
    %v2409 = vpop.permute.xlu0 %2408
    %2410 = vrot.lane.b32.xlu0 %v2378, 127
    %v2411 = vpop.permute.xlu0 %2410
    %2412 = vrot.lane.b32.xlu0 %v2380, 127
    %v2413 = vpop.permute.xlu0 %2412
    %2414 = vrot.lane.b32.xlu0 %v2382, 127
    %v2415 = vpop.permute.xlu0 %2414
    %2416 = vrot.lane.b32.xlu0 %v2384, 127
    %v2417 = vpop.permute.xlu0 %2416
    %2418 = vrot.lane.b32.xlu0 %v2386, 127
    %v2419 = vpop.permute.xlu0 %2418
    %2420 = vrot.lane.b32.xlu0 %v2388, 127
    %v2421 = vpop.permute.xlu0 %2420
    %2422 = vrot.lane.b32.xlu0 %v2390, 127
    %v2423 = vpop.permute.xlu0 %2422
    %2424 = vrot.lane.b32.xlu0 %v2392, 127
    %v2425 = vpop.permute.xlu0 %2424
    %2426 = vrot.lane.b32.xlu0 %v2363, 127
    %v2427 = vpop.permute.xlu0 %2426
    %2428 = vrot.lane.b32.xlu0 %v2365, 127
    %v2429 = vpop.permute.xlu0 %2428
    %2430 = vrot.lane.b32.xlu0 %v2367, 127
    %v2431 = vpop.permute.xlu0 %2430
    %2432 = vrot.lane.b32.xlu0 %v2369, 127
    %v2433 = vpop.permute.xlu0 %2432
    %2434 = vrot.lane.b32.xlu0 %v2371, 127
    %v2435 = vpop.permute.xlu0 %2434
    %2436 = vrot.lane.b32.xlu0 %v2373, 127
    %v2437 = vpop.permute.xlu0 %2436
    %2438 = vrot.lane.b32.xlu0 %v2375, 127
    %v2439 = vpop.permute.xlu0 %2438
    %2440 = vrot.lane.b32.xlu0 %v2377, 127
    %v2441 = vpop.permute.xlu0 %2440
    %2442 = vrot.lane.b32.xlu0 %v2379, 127
    %v2443 = vpop.permute.xlu0 %2442
    %2444 = vrot.lane.b32.xlu0 %v2381, 127
    %v2445 = vpop.permute.xlu0 %2444
    %2446 = vrot.lane.b32.xlu0 %v2383, 127
    %v2447 = vpop.permute.xlu0 %2446
    %2448 = vrot.lane.b32.xlu0 %v2385, 127
    %v2449 = vpop.permute.xlu0 %2448
    %2450 = vrot.lane.b32.xlu0 %v2387, 127
    %v2451 = vpop.permute.xlu0 %2450
    %2452 = vrot.lane.b32.xlu0 %v2389, 127
    %v2453 = vpop.permute.xlu0 %2452
    %2454 = vrot.lane.b32.xlu0 %v2391, 127
    %v2455 = vpop.permute.xlu0 %2454
    %2456 = vrot.lane.b32.xlu0 %v2393, 127
    %v2457 = vpop.permute.xlu0 %2456
    %v2458 = vsel %vm1986, %v2395, %v2427
    %v2459 = vsel %vm1986, %v2397, %v2429
    %v2460 = vsel %vm1986, %v2399, %v2431
    %v2461 = vsel %vm1986, %v2401, %v2433
    %v2462 = vsel %vm1986, %v2403, %v2435
    %v2463 = vsel %vm1986, %v2405, %v2437
    %v2464 = vsel %vm1986, %v2407, %v2439
    %v2465 = vsel %vm1986, %v2409, %v2441
    %v2466 = vsel %vm1986, %v2411, %v2443
    %v2467 = vsel %vm1986, %v2413, %v2445
    %v2468 = vsel %vm1986, %v2415, %v2447
    %v2469 = vsel %vm1986, %v2417, %v2449
    %v2470 = vsel %vm1986, %v2419, %v2451
    %v2471 = vsel %vm1986, %v2421, %v2453
    %v2472 = vsel %vm1986, %v2423, %v2455
    %v2473 = vsel %vm1986, %v2425, %v2457
    %v2474 = vsel %vm1986, %v2427, %v2395
    %v2475 = vsel %vm1986, %v2429, %v2397
    %v2476 = vsel %vm1986, %v2431, %v2399
    %v2477 = vsel %vm1986, %v2433, %v2401
    %v2478 = vsel %vm1986, %v2435, %v2403
    %v2479 = vsel %vm1986, %v2437, %v2405
    %v2480 = vsel %vm1986, %v2439, %v2407
    %v2481 = vsel %vm1986, %v2441, %v2409
    %v2482 = vsel %vm1986, %v2443, %v2411
    %v2483 = vsel %vm1986, %v2445, %v2413
    %v2484 = vsel %vm1986, %v2447, %v2415
    %v2485 = vsel %vm1986, %v2449, %v2417
    %v2486 = vsel %vm1986, %v2451, %v2419
    %v2487 = vsel %vm1986, %v2453, %v2421
    %v2488 = vsel %vm1986, %v2455, %v2423
    %v2489 = vsel %vm1986, %v2457, %v2425
    %v2490 = vmax.f32 %v2362, %v2458
    %v2491 = vmax.f32 %v2363, %v2474
    %v2492 = vmax.f32 %v2364, %v2459
    %v2493 = vmax.f32 %v2365, %v2475
    %v2494 = vmax.f32 %v2366, %v2460
    %v2495 = vmax.f32 %v2367, %v2476
    %v2496 = vmax.f32 %v2368, %v2461
    %v2497 = vmax.f32 %v2369, %v2477
    %v2498 = vmax.f32 %v2370, %v2462
    %v2499 = vmax.f32 %v2371, %v2478
    %v2500 = vmax.f32 %v2372, %v2463
    %v2501 = vmax.f32 %v2373, %v2479
    %v2502 = vmax.f32 %v2374, %v2464
    %v2503 = vmax.f32 %v2375, %v2480
    %v2504 = vmax.f32 %v2376, %v2465
    %v2505 = vmax.f32 %v2377, %v2481
    %v2506 = vmax.f32 %v2378, %v2466
    %v2507 = vmax.f32 %v2379, %v2482
    %v2508 = vmax.f32 %v2380, %v2467
    %v2509 = vmax.f32 %v2381, %v2483
    %v2510 = vmax.f32 %v2382, %v2468
    %v2511 = vmax.f32 %v2383, %v2484
    %v2512 = vmax.f32 %v2384, %v2469
    %v2513 = vmax.f32 %v2385, %v2485
    %v2514 = vmax.f32 %v2386, %v2470
    %v2515 = vmax.f32 %v2387, %v2486
    %v2516 = vmax.f32 %v2388, %v2471
    %v2517 = vmax.f32 %v2389, %v2487
    %v2518 = vmax.f32 %v2390, %v2472
    %v2519 = vmax.f32 %v2391, %v2488
    %v2520 = vmax.f32 %v2392, %v2473
    %v2521 = vmax.f32 %v2393, %v2489
    %v2522 = vpack.c.bf16 %v2492, %v2490
    %v2523 = vpack.c.bf16 %v2493, %v2491
    %v2524 = vpack.c.bf16 %v2496, %v2494
    %v2525 = vpack.c.bf16 %v2497, %v2495
    %v2526 = vpack.c.bf16 %v2500, %v2498
    %v2527 = vpack.c.bf16 %v2501, %v2499
    %v2528 = vpack.c.bf16 %v2504, %v2502
    %v2529 = vpack.c.bf16 %v2505, %v2503
    %v2530 = vpack.c.bf16 %v2508, %v2506
    %v2531 = vpack.c.bf16 %v2509, %v2507
    %v2532 = vpack.c.bf16 %v2512, %v2510
    %v2533 = vpack.c.bf16 %v2513, %v2511
    %v2534 = vpack.c.bf16 %v2516, %v2514
    %v2535 = vpack.c.bf16 %v2517, %v2515
    %v2536 = vpack.c.bf16 %v2520, %v2518
    %v2537 = vpack.c.bf16 %v2521, %v2519
    %v2538 = vld [vmem:[%s4] sm:$0xf]
    %v2539 = vld [vmem:[%s4 + $0x4] sm:$0xf]
    %v2540 = vld [vmem:[%s4 + $0x8] sm:$0xf]
    %v2541 = vld [vmem:[%s4 + $0xc] sm:$0xf]
    %v2542 = vld [vmem:[%s4 + $0x10] sm:$0xf]
    %v2543 = vld [vmem:[%s4 + $0x14] sm:$0xf]
    %v2544 = vld [vmem:[%s4 + $0x18] sm:$0xf]
    %v2545 = vld [vmem:[%s4 + $0x1c] sm:$0xf]
    %v2546 = vld [vmem:[%s4 + $0x20] sm:$0xf]
    %v2547 = vld [vmem:[%s4 + $0x24] sm:$0xf]
    %v2548 = vld [vmem:[%s4 + $0x28] sm:$0xf]
    %v2549 = vld [vmem:[%s4 + $0x2c] sm:$0xf]
    %v2550 = vld [vmem:[%s4 + $0x30] sm:$0xf]
    %v2551 = vld [vmem:[%s4 + $0x34] sm:$0xf]
    %v2552 = vld [vmem:[%s4 + $0x38] sm:$0xf]
    %v2553 = vld [vmem:[%s4 + $0x3c] sm:$0xf]
    %v2554 = vld [vmem:[%s4 + $0x40] sm:$0xf]
    %v2555 = vld [vmem:[%s4 + $0x44] sm:$0xf]
    %v2556 = vld [vmem:[%s4 + $0x48] sm:$0xf]
    %v2557 = vld [vmem:[%s4 + $0x4c] sm:$0xf]
    %v2558 = vld [vmem:[%s4 + $0x50] sm:$0xf]
    %v2559 = vld [vmem:[%s4 + $0x54] sm:$0xf]
    %v2560 = vld [vmem:[%s4 + $0x58] sm:$0xf]
    %v2561 = vld [vmem:[%s4 + $0x5c] sm:$0xf]
    %v2562 = vld [vmem:[%s4 + $0x60] sm:$0xf]
    %v2563 = vld [vmem:[%s4 + $0x64] sm:$0xf]
    %v2564 = vld [vmem:[%s4 + $0x68] sm:$0xf]
    %v2565 = vld [vmem:[%s4 + $0x6c] sm:$0xf]
    %v2566 = vld [vmem:[%s4 + $0x70] sm:$0xf]
    %v2567 = vld [vmem:[%s4 + $0x74] sm:$0xf]
    %v2568 = vld [vmem:[%s4 + $0x78] sm:$0xf]
    %v2569 = vld [vmem:[%s4 + $0x7c] sm:$0xf]
    %v2570 = vld [vmem:[%s5] sm:$0x1]
    %v2572 = vperm.slane %v2570, 0
    %v2606 = vunpack.c.l.b16 %v2538
    %v2607 = vunpack.c.l.b16 %v2539
    %v2608 = vunpack.c.l.b16 %v2540
    %v2609 = vunpack.c.l.b16 %v2541
    %v2610 = vunpack.c.l.b16 %v2542
    %v2611 = vunpack.c.l.b16 %v2543
    %v2612 = vunpack.c.l.b16 %v2544
    %v2613 = vunpack.c.l.b16 %v2545
    %v2614 = vunpack.c.l.b16 %v2546
    %v2615 = vunpack.c.l.b16 %v2547
    %v2616 = vunpack.c.l.b16 %v2548
    %v2617 = vunpack.c.l.b16 %v2549
    %v2618 = vunpack.c.l.b16 %v2550
    %v2619 = vunpack.c.l.b16 %v2551
    %v2620 = vunpack.c.l.b16 %v2552
    %v2621 = vunpack.c.l.b16 %v2553
    %v2622 = vunpack.c.l.b16 %v2554
    %v2623 = vunpack.c.l.b16 %v2555
    %v2624 = vunpack.c.l.b16 %v2556
    %v2625 = vunpack.c.l.b16 %v2557
    %v2626 = vunpack.c.l.b16 %v2558
    %v2627 = vunpack.c.l.b16 %v2559
    %v2628 = vunpack.c.l.b16 %v2560
    %v2629 = vunpack.c.l.b16 %v2561
    %v2630 = vunpack.c.l.b16 %v2562
    %v2631 = vunpack.c.l.b16 %v2563
    %v2632 = vunpack.c.l.b16 %v2564
    %v2633 = vunpack.c.l.b16 %v2565
    %v2634 = vunpack.c.l.b16 %v2566
    %v2635 = vunpack.c.l.b16 %v2567
    %v2636 = vunpack.c.l.b16 %v2568
    %v2637 = vunpack.c.l.b16 %v2569
    %v2638 = vpack.c.b16 %v2607, %v2606
    %v2639 = vpack.c.b16 %v2609, %v2608
    %v2640 = vpack.c.b16 %v2611, %v2610
    %v2641 = vpack.c.b16 %v2613, %v2612
    %v2642 = vpack.c.b16 %v2615, %v2614
    %v2643 = vpack.c.b16 %v2617, %v2616
    %v2644 = vpack.c.b16 %v2619, %v2618
    %v2645 = vpack.c.b16 %v2621, %v2620
    %v2646 = vpack.c.b16 %v2623, %v2622
    %v2647 = vpack.c.b16 %v2625, %v2624
    %v2648 = vpack.c.b16 %v2627, %v2626
    %v2649 = vpack.c.b16 %v2629, %v2628
    %v2650 = vpack.c.b16 %v2631, %v2630
    %v2651 = vpack.c.b16 %v2633, %v2632
    %v2652 = vpack.c.b16 %v2635, %v2634
    %v2653 = vpack.c.b16 %v2637, %v2636
    %2670 = vmatpush.bf16.msra.mxu0 %v2645
    %2671 = vmatpush.bf16.msra.mxu0 %v2644
    %2672 = vmatpush.bf16.msra.mxu0 %v2643
    %2673 = vmatpush.bf16.msra.mxu0 %v2642
    %2674 = vmatpush.bf16.msra.mxu0 %v2641
    %2675 = vmatpush.bf16.msra.mxu0 %v2640
    %2676 = vmatpush.bf16.msra.mxu0 %v2639
    %2677 = vmatpush.bf16.msra.mxu0 %v2638
    %2678 = vmatmul.bf16.gmra.mxu0 %v2522
    %v2679 = vpop.f32.mrf.mxu0
    %v2680 = vadd.f32 %v2572, %v2679
    %v2681 = vpop.f32.mrf.mxu0
    %v2682 = vadd.f32 %v2572, %v2681
    %2683 = vmatmul.bf16.gmra.mxu0 %v2524
    %v2684 = vpop.f32.mrf.mxu0
    %v2685 = vadd.f32 %v2572, %v2684
    %v2686 = vpop.f32.mrf.mxu0
    %v2687 = vadd.f32 %v2572, %v2686
    %2688 = vmatmul.bf16.gmra.mxu0 %v2526
    %v2689 = vpop.f32.mrf.mxu0
    %v2690 = vadd.f32 %v2572, %v2689
    %v2691 = vpop.f32.mrf.mxu0
    %v2692 = vadd.f32 %v2572, %v2691
    %2693 = vmatmul.bf16.gmra.mxu0 %v2528
    %v2694 = vpop.f32.mrf.mxu0
    %v2695 = vadd.f32 %v2572, %v2694
    %v2696 = vpop.f32.mrf.mxu0
    %v2697 = vadd.f32 %v2572, %v2696
    %2698 = vmatmul.bf16.gmra.mxu0 %v2530
    %v2699 = vpop.f32.mrf.mxu0
    %v2700 = vadd.f32 %v2572, %v2699
    %v2701 = vpop.f32.mrf.mxu0
    %v2702 = vadd.f32 %v2572, %v2701
    %2703 = vmatmul.bf16.gmra.mxu0 %v2532
    %v2704 = vpop.f32.mrf.mxu0
    %v2705 = vadd.f32 %v2572, %v2704
    %v2706 = vpop.f32.mrf.mxu0
    %v2707 = vadd.f32 %v2572, %v2706
    %2708 = vmatmul.bf16.gmra.mxu0 %v2534
    %v2709 = vpop.f32.mrf.mxu0
    %v2710 = vadd.f32 %v2572, %v2709
    %v2711 = vpop.f32.mrf.mxu0
    %v2712 = vadd.f32 %v2572, %v2711
    %2713 = vmatmul.bf16.gmra.mxu0 %v2536
    %v2714 = vpop.f32.mrf.mxu0
    %v2715 = vadd.f32 %v2572, %v2714
    %v2716 = vpop.f32.mrf.mxu0
    %v2717 = vadd.f32 %v2572, %v2716
    %2718 = vdwg.mxu0
    %2719 = vmatpush.bf16.msra.mxu0 %v2653
    %2720 = vmatpush.bf16.msra.mxu0 %v2652
    %2721 = vmatpush.bf16.msra.mxu0 %v2651
    %2722 = vmatpush.bf16.msra.mxu0 %v2650
    %2723 = vmatpush.bf16.msra.mxu0 %v2649
    %2724 = vmatpush.bf16.msra.mxu0 %v2648
    %2725 = vmatpush.bf16.msra.mxu0 %v2647
    %2726 = vmatpush.bf16.msra.mxu0 %v2646
    %2727 = vmatmul.bf16.gmra.mxu0 %v2523
    %v2728 = vpop.f32.mrf.mxu0
    %v2729 = vadd.f32 %v2680, %v2728
    %v2730 = vpop.f32.mrf.mxu0
    %v2731 = vadd.f32 %v2682, %v2730
    %2732 = vmatmul.bf16.gmra.mxu0 %v2525
    %v2733 = vpop.f32.mrf.mxu0
    %v2734 = vadd.f32 %v2685, %v2733
    %v2735 = vpop.f32.mrf.mxu0
    %v2736 = vadd.f32 %v2687, %v2735
    %2737 = vmatmul.bf16.gmra.mxu0 %v2527
    %v2738 = vpop.f32.mrf.mxu0
    %v2739 = vadd.f32 %v2690, %v2738
    %v2740 = vpop.f32.mrf.mxu0
    %v2741 = vadd.f32 %v2692, %v2740
    %2742 = vmatmul.bf16.gmra.mxu0 %v2529
    %v2743 = vpop.f32.mrf.mxu0
    %v2744 = vadd.f32 %v2695, %v2743
    %v2745 = vpop.f32.mrf.mxu0
    %v2746 = vadd.f32 %v2697, %v2745
    %2747 = vmatmul.bf16.gmra.mxu0 %v2531
    %v2748 = vpop.f32.mrf.mxu0
    %v2749 = vadd.f32 %v2700, %v2748
    %v2750 = vpop.f32.mrf.mxu0
    %v2751 = vadd.f32 %v2702, %v2750
    %2752 = vmatmul.bf16.gmra.mxu0 %v2533
    %v2753 = vpop.f32.mrf.mxu0
    %v2754 = vadd.f32 %v2705, %v2753
    %v2755 = vpop.f32.mrf.mxu0
    %v2756 = vadd.f32 %v2707, %v2755
    %2757 = vmatmul.bf16.gmra.mxu0 %v2535
    %v2758 = vpop.f32.mrf.mxu0
    %v2759 = vadd.f32 %v2710, %v2758
    %v2760 = vpop.f32.mrf.mxu0
    %v2761 = vadd.f32 %v2712, %v2760
    %2762 = vmatmul.bf16.gmra.mxu0 %v2537
    %v2763 = vpop.f32.mrf.mxu0
    %v2764 = vadd.f32 %v2715, %v2763
    %v2765 = vpop.f32.mrf.mxu0
    %v2766 = vadd.f32 %v2717, %v2765
    %2767 = vdwg.mxu0
    %v2768 = vmax.f32 %v2729, 0.0
    %v2769 = vmax.f32 %v2731, 0.0
    %v2770 = vmax.f32 %v2734, 0.0
    %v2771 = vmax.f32 %v2736, 0.0
    %v2772 = vmax.f32 %v2739, 0.0
    %v2773 = vmax.f32 %v2741, 0.0
    %v2774 = vmax.f32 %v2744, 0.0
    %v2775 = vmax.f32 %v2746, 0.0
    %v2776 = vmax.f32 %v2749, 0.0
    %v2777 = vmax.f32 %v2751, 0.0
    %v2778 = vmax.f32 %v2754, 0.0
    %v2779 = vmax.f32 %v2756, 0.0
    %v2780 = vmax.f32 %v2759, 0.0
    %v2781 = vmax.f32 %v2761, 0.0
    %v2782 = vmax.f32 %v2764, 0.0
    %v2783 = vmax.f32 %v2766, 0.0
    %v2784 = vpack.c.bf16 %v2769, %v2768
    %v2785 = vpack.c.bf16 %v2771, %v2770
    %v2786 = vpack.c.bf16 %v2773, %v2772
    %v2787 = vpack.c.bf16 %v2775, %v2774
    %v2788 = vpack.c.bf16 %v2777, %v2776
    %v2789 = vpack.c.bf16 %v2779, %v2778
    %v2790 = vpack.c.bf16 %v2781, %v2780
    %v2791 = vpack.c.bf16 %v2783, %v2782
    %v2792 = vld [vmem:[%s6] sm:$0xf]
    %v2793 = vld [vmem:[%s6 + $0x4] sm:$0xf]
    %v2794 = vld [vmem:[%s6 + $0x8] sm:$0xf]
    %v2795 = vld [vmem:[%s6 + $0xc] sm:$0xf]
    %v2796 = vld [vmem:[%s6 + $0x10] sm:$0xf]
    %v2797 = vld [vmem:[%s6 + $0x14] sm:$0xf]
    %v2798 = vld [vmem:[%s6 + $0x18] sm:$0xf]
    %v2799 = vld [vmem:[%s6 + $0x1c] sm:$0xf]
    %v2800 = vld [vmem:[%s6 + $0x20] sm:$0xf]
    %v2801 = vld [vmem:[%s6 + $0x24] sm:$0xf]
    %v2802 = vld [vmem:[%s6 + $0x28] sm:$0xf]
    %v2803 = vld [vmem:[%s6 + $0x2c] sm:$0xf]
    %v2804 = vld [vmem:[%s6 + $0x30] sm:$0xf]
    %v2805 = vld [vmem:[%s6 + $0x34] sm:$0xf]
    %v2806 = vld [vmem:[%s6 + $0x38] sm:$0xf]
    %v2807 = vld [vmem:[%s6 + $0x3c] sm:$0xf]
    %v2808 = vld [vmem:[%s7] sm:$0x1]
    %v2810 = vperm.slane %v2808, 0
    %v2828 = vunpack.c.l.b16 %v2792
    %v2829 = vunpack.c.l.b16 %v2793
    %v2830 = vunpack.c.l.b16 %v2794
    %v2831 = vunpack.c.l.b16 %v2795
    %v2832 = vunpack.c.l.b16 %v2796
    %v2833 = vunpack.c.l.b16 %v2797
    %v2834 = vunpack.c.l.b16 %v2798
    %v2835 = vunpack.c.l.b16 %v2799
    %v2836 = vunpack.c.l.b16 %v2800
    %v2837 = vunpack.c.l.b16 %v2801
    %v2838 = vunpack.c.l.b16 %v2802
    %v2839 = vunpack.c.l.b16 %v2803
    %v2840 = vunpack.c.l.b16 %v2804
    %v2841 = vunpack.c.l.b16 %v2805
    %v2842 = vunpack.c.l.b16 %v2806
    %v2843 = vunpack.c.l.b16 %v2807
    %v2844 = vpack.c.b16 %v2829, %v2828
    %v2845 = vpack.c.b16 %v2831, %v2830
    %v2846 = vpack.c.b16 %v2833, %v2832
    %v2847 = vpack.c.b16 %v2835, %v2834
    %v2848 = vpack.c.b16 %v2837, %v2836
    %v2849 = vpack.c.b16 %v2839, %v2838
    %v2850 = vpack.c.b16 %v2841, %v2840
    %v2851 = vpack.c.b16 %v2843, %v2842
    %2860 = vmatpush.bf16.msra.mxu0 %v2851
    %2861 = vmatpush.bf16.msra.mxu0 %v2850
    %2862 = vmatpush.bf16.msra.mxu0 %v2849
    %2863 = vmatpush.bf16.msra.mxu0 %v2848
    %2864 = vmatpush.bf16.msra.mxu0 %v2847
    %2865 = vmatpush.bf16.msra.mxu0 %v2846
    %2866 = vmatpush.bf16.msra.mxu0 %v2845
    %2867 = vmatpush.bf16.msra.mxu0 %v2844
    %2868 = vmatmul.bf16.gmra.mxu0 %v2784
    %v2869 = vpop.f32.mrf.mxu0
    %v2870 = vadd.f32 %v2810, %v2869
    %v2871 = vpop.f32.mrf.mxu0
    %v2872 = vadd.f32 %v2810, %v2871
    %2873 = vmatmul.bf16.gmra.mxu0 %v2785
    %v2874 = vpop.f32.mrf.mxu0
    %v2875 = vadd.f32 %v2810, %v2874
    %v2876 = vpop.f32.mrf.mxu0
    %v2877 = vadd.f32 %v2810, %v2876
    %2878 = vmatmul.bf16.gmra.mxu0 %v2786
    %v2879 = vpop.f32.mrf.mxu0
    %v2880 = vadd.f32 %v2810, %v2879
    %v2881 = vpop.f32.mrf.mxu0
    %v2882 = vadd.f32 %v2810, %v2881
    %2883 = vmatmul.bf16.gmra.mxu0 %v2787
    %v2884 = vpop.f32.mrf.mxu0
    %v2885 = vadd.f32 %v2810, %v2884
    %v2886 = vpop.f32.mrf.mxu0
    %v2887 = vadd.f32 %v2810, %v2886
    %2888 = vmatmul.bf16.gmra.mxu0 %v2788
    %v2889 = vpop.f32.mrf.mxu0
    %v2890 = vadd.f32 %v2810, %v2889
    %v2891 = vpop.f32.mrf.mxu0
    %v2892 = vadd.f32 %v2810, %v2891
    %2893 = vmatmul.bf16.gmra.mxu0 %v2789
    %v2894 = vpop.f32.mrf.mxu0
    %v2895 = vadd.f32 %v2810, %v2894
    %v2896 = vpop.f32.mrf.mxu0
    %v2897 = vadd.f32 %v2810, %v2896
    %2898 = vmatmul.bf16.gmra.mxu0 %v2790
    %v2899 = vpop.f32.mrf.mxu0
    %v2900 = vadd.f32 %v2810, %v2899
    %v2901 = vpop.f32.mrf.mxu0
    %v2902 = vadd.f32 %v2810, %v2901
    %2903 = vmatmul.bf16.gmra.mxu0 %v2791
    %v2904 = vpop.f32.mrf.mxu0
    %v2905 = vadd.f32 %v2810, %v2904
    %v2906 = vpop.f32.mrf.mxu0
    %v2907 = vadd.f32 %v2810, %v2906
    %2908 = vdwg.mxu0
    %v2909 = vmax.f32 %v2870, 0.0
    %v2910 = vmax.f32 %v2872, 0.0
    %v2911 = vmax.f32 %v2875, 0.0
    %v2912 = vmax.f32 %v2877, 0.0
    %v2913 = vmax.f32 %v2880, 0.0
    %v2914 = vmax.f32 %v2882, 0.0
    %v2915 = vmax.f32 %v2885, 0.0
    %v2916 = vmax.f32 %v2887, 0.0
    %v2917 = vmax.f32 %v2890, 0.0
    %v2918 = vmax.f32 %v2892, 0.0
    %v2919 = vmax.f32 %v2895, 0.0
    %v2920 = vmax.f32 %v2897, 0.0
    %v2921 = vmax.f32 %v2900, 0.0
    %v2922 = vmax.f32 %v2902, 0.0
    %v2923 = vmax.f32 %v2905, 0.0
    %v2924 = vmax.f32 %v2907, 0.0
    %2925 = vst [vmem:[%s8] sm:$0xff] %v2909
    %2926 = vst [vmem:[%s8 + $0x8] sm:$0xff] %v2910
    %2927 = vst [vmem:[%s8 + $0x10] sm:$0xff] %v2911
    %2928 = vst [vmem:[%s8 + $0x18] sm:$0xff] %v2912
    %2929 = vst [vmem:[%s8 + $0x20] sm:$0xff] %v2913
    %2930 = vst [vmem:[%s8 + $0x28] sm:$0xff] %v2914
    %2931 = vst [vmem:[%s8 + $0x30] sm:$0xff] %v2915
    %2932 = vst [vmem:[%s8 + $0x38] sm:$0xff] %v2916
    %2933 = vst [vmem:[%s8 + $0x40] sm:$0xff] %v2917
    %2934 = vst [vmem:[%s8 + $0x48] sm:$0xff] %v2918
    %2935 = vst [vmem:[%s8 + $0x50] sm:$0xff] %v2919
    %2936 = vst [vmem:[%s8 + $0x58] sm:$0xff] %v2920
    %2937 = vst [vmem:[%s8 + $0x60] sm:$0xff] %v2921
    %2938 = vst [vmem:[%s8 + $0x68] sm:$0xff] %v2922
    %2939 = vst [vmem:[%s8 + $0x70] sm:$0xff] %v2923
    %2940 = vst [vmem:[%s8 + $0x78] sm:$0xff] %v2924
    // Predicated region
    $region42: #{model4_forward.1} parent=1 // pred_check
      _
    $region43: #{model4_forward.1} parent=1 // pred_check_branch
      %2942 = sbr.rel (0) target = $region45
    $region44: #{model4_forward.1} parent=1 // pred_region
      _
    $region45: #{model4_forward.1} parent=1 // pred_fallthru
      _
    // Predicated region
    $region46: #{model4_forward.1} parent=1 // pred_check
      _
    $region47: #{model4_forward.1} parent=1 // pred_check_branch
      %2944 = sbr.rel (0) target = $region49
    $region48: #{model4_forward.1} parent=1 // pred_region
      _
    $region49: #{model4_forward.1} parent=1 // pred_fallthru
      _
    %2945 = vsyncpa [#allocation4], 1
    %2946 = vsyncpa [#allocation5], 1

</llo_original>
